<compile_context>
chip_gen: v5e
topology: v5e:2x2
jax: 0.10.0
libtpu: 0.0.40
codegen_flags: <defaults>
</compile_context>

<pallas_src>
import jax
import jax.numpy as jnp
import numpy as np
from jax.experimental import pallas as pl
from jax.experimental.pallas import tpu as pltpu

RECHITS_DIM = (7, 23)   # (H, W), both odd as asserted in the PyTorch module
LANE = 128


def _round_up(n, m):
    return ((n + m - 1) // m) * m


def _make_kernel(compute_dtype):
    def kernel(x_ref, mask_ref,
               w1_ref, b1_ref, w2_ref, b2_ref, w3_ref, b3_ref,
               w4_ref, b4_ref, w5_ref, b5_ref,
               wsum_ref, weights_ref):
        x = x_ref[...]                                          # (TB, IN) f32

        # --- 5-layer MLP: matmul operands in compute_dtype (bf16 default),
        #     f32 accumulation; elementwise stays f32 (v5e-friendly).
        h = x.astype(compute_dtype)
        for w_ref, b_ref in ((w1_ref, b1_ref), (w2_ref, b2_ref),
                             (w3_ref, b3_ref), (w4_ref, b4_ref)):
            h = jnp.dot(h, w_ref[...],
                        preferred_element_type=jnp.float32) + b_ref[...]
            h = jnp.maximum(h, 0.0).astype(compute_dtype)
        logits = jnp.dot(h, w5_ref[...],
                         preferred_element_type=jnp.float32) + b5_ref[...]
        # exact sigmoid (user-visible output; avoids approx-reciprocal error)
        weights = 1.0 / (1.0 + jnp.exp(-logits))                # (TB, IN) f32

        weights_ref[...] = weights                              # direct (TB, IN) store

        # --- weighted sum over the flattened rechits ---
        weighted_sum = jnp.sum(weights * x, axis=1, keepdims=True)    # (TB, 1)

        # --- tower denominator: static 5x5-window mask (tiny VMEM-resident input) ---
        denom = jnp.sum(x * mask_ref[...], axis=1, keepdims=True)     # (TB, 1)

        wsum_ref[...] = weighted_sum / denom                    # narrow (TB, 1) store

    return kernel


def shower_shape_forward(xval, params, *, block_b=1024,
                         compute_dtype=jnp.bfloat16):
    """xval: (B, 1, H, W) float32. params: list of 5 (W_i, b_i) with W_i shaped
    (in, out). Returns [weighted_sum/denominator (B,), weights (B, H, W)]."""
    B, C, H, W = xval.shape
    assert C == 1
    in_sz = H * W                          # 161
    hid_sz = params[0][0].shape[1]         # 322
    hid_pad = _round_up(hid_sz, LANE)      # 384

    # Unpadded, free reshape of the NCHW tensor.
    x2d = xval.reshape(B, in_sz).astype(jnp.float32)

    # Zero-pad only the hidden dims of the params (tiny, one XLA op each) and cast
    # matmul weights once to compute_dtype. Padded rows/cols are exactly zero, so
    # the padded hidden lanes carry exact zeros through ReLU and contribute nothing.
    dims = [(in_sz, hid_sz), (hid_sz, hid_sz), (hid_sz, hid_sz),
            (hid_sz, hid_sz), (hid_sz, in_sz)]
    pdims = [(in_sz, hid_pad), (hid_pad, hid_pad), (hid_pad, hid_pad),
             (hid_pad, hid_pad), (hid_pad, in_sz)]
    flat_params = []
    for (w, b), (di, do), (pi, po) in zip(params, dims, pdims):
        assert tuple(w.shape) == (di, do)
        wp = jnp.zeros((pi, po), jnp.float32).at[:di, :do].set(
            w.astype(jnp.float32)).astype(compute_dtype)
        bp = jnp.zeros((1, po), jnp.float32).at[0, :do].set(
            b.reshape(-1).astype(jnp.float32))
        flat_params += [wp, bp]

    # Static 5x5 tower mask over channel 0 (trace-time numpy constant).
    cr, cc = H // 2, W // 2                # integer-division semantics of the original
    m2 = np.zeros((H, W), np.float32)
    m2[cr - 2:cr + 3, cc - 2:cc + 3] = 1.0
    mask = jnp.asarray(m2.reshape(1, in_sz))

    # Balanced batch tiles: amortize the ~0.35us/step grid overhead, fill the MXU,
    # use >= 2 tiles for large B (v7x megacore), and never a mostly-dead last tile.
    n_target = pl.cdiv(B, block_b)
    if B >= 256:
        n_target = max(n_target, 2)
    tb = min(_round_up(pl.cdiv(B, n_target), 8), B)   # mult. of 8, or == B (legal)
    n_tiles = pl.cdiv(B, tb)                          # partial last tile is masked

    def resident(a):   # stays VMEM-resident across all batch tiles
        return pl.BlockSpec(a.shape, lambda i: (0, 0))

    in_arrays = [x2d, mask] + flat_params
    in_specs = ([pl.BlockSpec((tb, in_sz), lambda i: (i, 0))]
                + [resident(a) for a in in_arrays[1:]])

    out_shapes = (
        jax.ShapeDtypeStruct((B, 1), jnp.float32),        # weighted_sum / denominator
        jax.ShapeDtypeStruct((B, in_sz), jnp.float32),    # weights (flat)
    )
    out_specs = (
        pl.BlockSpec((tb, 1), lambda i: (i, 0)),
        pl.BlockSpec((tb, in_sz), lambda i: (i, 0)),
    )

    wsum, weights = pl.pallas_call(
        _make_kernel(compute_dtype),
        out_shape=out_shapes,
        grid_spec=pltpu.PrefetchScalarGridSpec(
            num_scalar_prefetch=0,
            grid=(n_tiles,),
            in_specs=in_specs,
            out_specs=out_specs,
        ),
        compiler_params=pltpu.CompilerParams(
            # independent batch tiles -> megacore sharding on v7x, neutral elsewhere
            dimension_semantics=("parallel",)),
    )(*in_arrays)

    return [wsum.reshape(B), weights.reshape(B, H, W)]


def _reference_forward(xval, params):
    """Pure-JAX f32 reference mirroring the PyTorch module."""
    B, _, H, W = xval.shape
    h = xval.reshape(B, H * W)
    for i, (w, b) in enumerate(params):
        h = h @ w + b
        if i < 4:
            h = jnp.maximum(h, 0.0)
        else:
            h = jax.nn.sigmoid(h)
    weights = h
    weighted_sum = jnp.sum(weights * xval.reshape(B, -1), axis=1)
    cr, cc = H // 2, W // 2
    tower = xval[:, 0, cr - 2:cr + 3, cc - 2:cc + 3]
    denom = tower.sum(axis=(1, 2))
    return [weighted_sum / denom, weights.reshape(B, H, W)]


def _init_params(key, in_sz, hid_sz):
    """Deterministic Linear params, PyTorch-style uniform(-1/sqrt(fan_in), +)."""
    dims = [(in_sz, hid_sz), (hid_sz, hid_sz), (hid_sz, hid_sz),
            (hid_sz, hid_sz), (hid_sz, in_sz)]
    params = []
    for fan_in, fan_out in dims:
        key, kw, kb = jax.random.split(key, 3)
        bound = 1.0 / np.sqrt(fan_in)
        w = jax.random.uniform(kw, (fan_in, fan_out), jnp.float32, -bound, bound)
        b = jax.random.uniform(kb, (fan_out,), jnp.float32, -bound, bound)
        params.append((w, b))
    return params


if __name__ == "__main__":
    H, W = RECHITS_DIM
    in_sz = H * W          # 161
    hid_sz = 2 * in_sz     # 322

    key = jax.random.PRNGKey(0)
    key, kp = jax.random.split(key)
    params = _init_params(kp, in_sz, hid_sz)

    for B in (8, 260):     # small single tile, and two balanced tiles w/ partial last
        key, kx = jax.random.split(key)
        # positive rechit energies so the tower denominator is nonzero
        xval = jax.random.uniform(kx, (B, 1, H, W), jnp.float32, 0.05, 1.0)

        out = shower_shape_forward(xval, params)
        out = jax.block_until_ready(out)

        ref = _reference_forward(xval, params)
        # bf16 matmul operands (f32 accumulation) -> slightly looser tolerance
        np.testing.assert_allclose(np.asarray(out[0]), np.asarray(ref[0]),
                                   rtol=1e-2, atol=1e-3)
        np.testing.assert_allclose(np.asarray(out[1]), np.asarray(ref[1]),
                                   rtol=1e-2, atol=1e-3)

    print("KERNEL_OK")
</pallas_src>

<mosaic_0001>
module attributes {stable_mosaic.version = 11 : i64} {
  func.func @kernel(%arg0: i32, %arg1: memref<8x161xf32, #tpu.memory_space<vmem>>, %arg2: memref<1x161xf32, #tpu.memory_space<vmem>>, %arg3: memref<161x384xbf16, #tpu.memory_space<vmem>>, %arg4: memref<1x384xf32, #tpu.memory_space<vmem>>, %arg5: memref<384x384xbf16, #tpu.memory_space<vmem>>, %arg6: memref<1x384xf32, #tpu.memory_space<vmem>>, %arg7: memref<384x384xbf16, #tpu.memory_space<vmem>>, %arg8: memref<1x384xf32, #tpu.memory_space<vmem>>, %arg9: memref<384x384xbf16, #tpu.memory_space<vmem>>, %arg10: memref<1x384xf32, #tpu.memory_space<vmem>>, %arg11: memref<384x161xbf16, #tpu.memory_space<vmem>>, %arg12: memref<1x161xf32, #tpu.memory_space<vmem>>, %arg13: memref<8x1xf32, #tpu.memory_space<vmem>>, %arg14: memref<8x161xf32, #tpu.memory_space<vmem>>) attributes {dimension_semantics = [#tpu.dimension_semantics<parallel>], iteration_bounds = array<i64: 1>, scalar_prefetch = 0 : i64, scratch_operands = 0 : i64, tpu.core_type = #tpu.core_type<tc>, window_params = [{transform_indices = @transform_0, window_bounds = array<i64: 8, 161>}, {pipeline_mode = #tpu.pipeline_mode<synchronous>, transform_indices = @transform_1, window_bounds = array<i64: 1, 161>}, {pipeline_mode = #tpu.pipeline_mode<synchronous>, transform_indices = @transform_2, window_bounds = array<i64: 161, 384>}, {pipeline_mode = #tpu.pipeline_mode<synchronous>, transform_indices = @transform_3, window_bounds = array<i64: 1, 384>}, {pipeline_mode = #tpu.pipeline_mode<synchronous>, transform_indices = @transform_4, window_bounds = array<i64: 384, 384>}, {pipeline_mode = #tpu.pipeline_mode<synchronous>, transform_indices = @transform_5, window_bounds = array<i64: 1, 384>}, {pipeline_mode = #tpu.pipeline_mode<synchronous>, transform_indices = @transform_6, window_bounds = array<i64: 384, 384>}, {pipeline_mode = #tpu.pipeline_mode<synchronous>, transform_indices = @transform_7, window_bounds = array<i64: 1, 384>}, {pipeline_mode = #tpu.pipeline_mode<synchronous>, transform_indices = @transform_8, window_bounds = array<i64: 384, 384>}, {pipeline_mode = #tpu.pipeline_mode<synchronous>, transform_indices = @transform_9, window_bounds = array<i64: 1, 384>}, {pipeline_mode = #tpu.pipeline_mode<synchronous>, transform_indices = @transform_10, window_bounds = array<i64: 384, 161>}, {pipeline_mode = #tpu.pipeline_mode<synchronous>, transform_indices = @transform_11, window_bounds = array<i64: 1, 161>}, {transform_indices = @transform_12, window_bounds = array<i64: 8, 1>}, {transform_indices = @transform_13, window_bounds = array<i64: 8, 161>}]} {
    %c0 = arith.constant 0 : index
    %c0_0 = arith.constant 0 : index
    %0 = vector.load %arg1[%c0, %c0_0] : memref<8x161xf32, #tpu.memory_space<vmem>>, vector<8x161xf32>
    %1 = arith.truncf %0 : vector<8x161xf32> to vector<8x161xbf16>
    %c0_1 = arith.constant 0 : index
    %c0_2 = arith.constant 0 : index
    %2 = vector.load %arg3[%c0_1, %c0_2] : memref<161x384xbf16, #tpu.memory_space<vmem>>, vector<161x384xbf16>
    %cst = arith.constant dense<0.000000e+00> : vector<8x384xf32>
    %3 = tpu.matmul %1, %2, %cst {dimension_numbers = #tpu.dot_dimension_numbers<[1], [0], [0], [1], [0, 0, 1, 1], [], []>} : vector<8x161xbf16>, vector<161x384xbf16>, vector<8x384xf32> -> vector<8x384xf32>
    %c0_3 = arith.constant 0 : index
    %c0_4 = arith.constant 0 : index
    %4 = vector.load %arg4[%c0_3, %c0_4] : memref<1x384xf32, #tpu.memory_space<vmem>>, vector<1x384xf32>
    %5 = vector.broadcast %4 : vector<1x384xf32> to vector<8x384xf32>
    %6 = arith.addf %3, %5 : vector<8x384xf32>
    %cst_5 = arith.constant 0.000000e+00 : f32
    %7 = vector.broadcast %cst_5 : f32 to vector<8x384xf32>
    %8 = arith.maximumf %6, %7 : vector<8x384xf32>
    %9 = arith.truncf %8 : vector<8x384xf32> to vector<8x384xbf16>
    %c0_6 = arith.constant 0 : index
    %c0_7 = arith.constant 0 : index
    %10 = vector.load %arg5[%c0_6, %c0_7] : memref<384x384xbf16, #tpu.memory_space<vmem>>, vector<384x384xbf16>
    %cst_8 = arith.constant dense<0.000000e+00> : vector<8x384xf32>
    %11 = tpu.matmul %9, %10, %cst_8 {dimension_numbers = #tpu.dot_dimension_numbers<[1], [0], [0], [1], [0, 0, 1, 1], [], []>} : vector<8x384xbf16>, vector<384x384xbf16>, vector<8x384xf32> -> vector<8x384xf32>
    %c0_9 = arith.constant 0 : index
    %c0_10 = arith.constant 0 : index
    %12 = vector.load %arg6[%c0_9, %c0_10] : memref<1x384xf32, #tpu.memory_space<vmem>>, vector<1x384xf32>
    %13 = vector.broadcast %12 : vector<1x384xf32> to vector<8x384xf32>
    %14 = arith.addf %11, %13 : vector<8x384xf32>
    %cst_11 = arith.constant 0.000000e+00 : f32
    %15 = vector.broadcast %cst_11 : f32 to vector<8x384xf32>
    %16 = arith.maximumf %14, %15 : vector<8x384xf32>
    %17 = arith.truncf %16 : vector<8x384xf32> to vector<8x384xbf16>
    %c0_12 = arith.constant 0 : index
    %c0_13 = arith.constant 0 : index
    %18 = vector.load %arg7[%c0_12, %c0_13] : memref<384x384xbf16, #tpu.memory_space<vmem>>, vector<384x384xbf16>
    %cst_14 = arith.constant dense<0.000000e+00> : vector<8x384xf32>
    %19 = tpu.matmul %17, %18, %cst_14 {dimension_numbers = #tpu.dot_dimension_numbers<[1], [0], [0], [1], [0, 0, 1, 1], [], []>} : vector<8x384xbf16>, vector<384x384xbf16>, vector<8x384xf32> -> vector<8x384xf32>
    %c0_15 = arith.constant 0 : index
    %c0_16 = arith.constant 0 : index
    %20 = vector.load %arg8[%c0_15, %c0_16] : memref<1x384xf32, #tpu.memory_space<vmem>>, vector<1x384xf32>
    %21 = vector.broadcast %20 : vector<1x384xf32> to vector<8x384xf32>
    %22 = arith.addf %19, %21 : vector<8x384xf32>
    %cst_17 = arith.constant 0.000000e+00 : f32
    %23 = vector.broadcast %cst_17 : f32 to vector<8x384xf32>
    %24 = arith.maximumf %22, %23 : vector<8x384xf32>
    %25 = arith.truncf %24 : vector<8x384xf32> to vector<8x384xbf16>
    %c0_18 = arith.constant 0 : index
    %c0_19 = arith.constant 0 : index
    %26 = vector.load %arg9[%c0_18, %c0_19] : memref<384x384xbf16, #tpu.memory_space<vmem>>, vector<384x384xbf16>
    %cst_20 = arith.constant dense<0.000000e+00> : vector<8x384xf32>
    %27 = tpu.matmul %25, %26, %cst_20 {dimension_numbers = #tpu.dot_dimension_numbers<[1], [0], [0], [1], [0, 0, 1, 1], [], []>} : vector<8x384xbf16>, vector<384x384xbf16>, vector<8x384xf32> -> vector<8x384xf32>
    %c0_21 = arith.constant 0 : index
    %c0_22 = arith.constant 0 : index
    %28 = vector.load %arg10[%c0_21, %c0_22] : memref<1x384xf32, #tpu.memory_space<vmem>>, vector<1x384xf32>
    %29 = vector.broadcast %28 : vector<1x384xf32> to vector<8x384xf32>
    %30 = arith.addf %27, %29 : vector<8x384xf32>
    %cst_23 = arith.constant 0.000000e+00 : f32
    %31 = vector.broadcast %cst_23 : f32 to vector<8x384xf32>
    %32 = arith.maximumf %30, %31 : vector<8x384xf32>
    %33 = arith.truncf %32 : vector<8x384xf32> to vector<8x384xbf16>
    %c0_24 = arith.constant 0 : index
    %c0_25 = arith.constant 0 : index
    %34 = vector.load %arg11[%c0_24, %c0_25] : memref<384x161xbf16, #tpu.memory_space<vmem>>, vector<384x161xbf16>
    %cst_26 = arith.constant dense<0.000000e+00> : vector<8x161xf32>
    %35 = tpu.matmul %33, %34, %cst_26 {dimension_numbers = #tpu.dot_dimension_numbers<[1], [0], [0], [1], [0, 0, 1, 1], [], []>} : vector<8x384xbf16>, vector<384x161xbf16>, vector<8x161xf32> -> vector<8x161xf32>
    %c0_27 = arith.constant 0 : index
    %c0_28 = arith.constant 0 : index
    %36 = vector.load %arg12[%c0_27, %c0_28] : memref<1x161xf32, #tpu.memory_space<vmem>>, vector<1x161xf32>
    %37 = vector.broadcast %36 : vector<1x161xf32> to vector<8x161xf32>
    %38 = arith.addf %35, %37 : vector<8x161xf32>
    %cst_29 = arith.constant 0.000000e+00 : f32
    %39 = vector.broadcast %cst_29 : f32 to vector<8x161xf32>
    %40 = arith.subf %39, %38 : vector<8x161xf32>
    %41 = math.exp %40 : vector<8x161xf32>
    %cst_30 = arith.constant 1.000000e+00 : f32
    %42 = vector.broadcast %cst_30 : f32 to vector<8x161xf32>
    %43 = arith.addf %42, %41 : vector<8x161xf32>
    %cst_31 = arith.constant 1.000000e+00 : f32
    %44 = vector.broadcast %cst_31 : f32 to vector<8x161xf32>
    %45 = arith.divf %44, %43 : vector<8x161xf32>
    %c0_32 = arith.constant 0 : index
    %c0_33 = arith.constant 0 : index
    %46 = vector.load %arg14[%c0_32, %c0_33] : memref<8x161xf32, #tpu.memory_space<vmem>>, vector<8x161xf32>
    tpu.vector_store %arg14[%c0_32, %c0_33], %45 {strides = array<i32>} : memref<8x161xf32, #tpu.memory_space<vmem>>, vector<8x161xf32>,
    %47 = arith.mulf %45, %0 : vector<8x161xf32>
    %cst_34 = arith.constant dense<0.000000e+00> : vector<8xf32>
    %48 = vector.multi_reduction <add>, %47, %cst_34 [1] : vector<8x161xf32> to vector<8xf32>
    %49 = vector.shape_cast %48 : vector<8xf32> to vector<8x1xf32>
    %c0_35 = arith.constant 0 : index
    %c0_36 = arith.constant 0 : index
    %50 = vector.load %arg2[%c0_35, %c0_36] : memref<1x161xf32, #tpu.memory_space<vmem>>, vector<1x161xf32>
    %51 = vector.broadcast %50 : vector<1x161xf32> to vector<8x161xf32>
    %52 = arith.mulf %0, %51 : vector<8x161xf32>
    %cst_37 = arith.constant dense<0.000000e+00> : vector<8xf32>
    %53 = vector.multi_reduction <add>, %52, %cst_37 [1] : vector<8x161xf32> to vector<8xf32>
    %54 = vector.shape_cast %53 : vector<8xf32> to vector<8x1xf32>
    %55 = arith.divf %49, %54 : vector<8x1xf32>
    %c0_38 = arith.constant 0 : index
    %c0_39 = arith.constant 0 : index
    %56 = vector.load %arg13[%c0_38, %c0_39] : memref<8x1xf32, #tpu.memory_space<vmem>>, vector<8x1xf32>
    tpu.vector_store %arg13[%c0_38, %c0_39], %55 {strides = array<i32>} : memref<8x1xf32, #tpu.memory_space<vmem>>, vector<8x1xf32>,
    return
  }
  func.func @transform_0(%arg0: i32) -> (i32, i32) {
    %c0_i32 = arith.constant 0 : i32
    %c0_i32_0 = arith.constant 0 : i32
    return %arg0, %c0_i32 : i32, i32
  }
  func.func @transform_1(%arg0: i32) -> (i32, i32) {
    %c0_i32 = arith.constant 0 : i32
    %c0_i32_0 = arith.constant 0 : i32
    %c0_i32_1 = arith.constant 0 : i32
    return %c0_i32, %c0_i32_0 : i32, i32
  }
  func.func @transform_2(%arg0: i32) -> (i32, i32) {
    %c0_i32 = arith.constant 0 : i32
    %c0_i32_0 = arith.constant 0 : i32
    %c0_i32_1 = arith.constant 0 : i32
    return %c0_i32, %c0_i32_0 : i32, i32
  }
  func.func @transform_3(%arg0: i32) -> (i32, i32) {
    %c0_i32 = arith.constant 0 : i32
    %c0_i32_0 = arith.constant 0 : i32
    %c0_i32_1 = arith.constant 0 : i32
    return %c0_i32, %c0_i32_0 : i32, i32
  }
  func.func @transform_4(%arg0: i32) -> (i32, i32) {
    %c0_i32 = arith.constant 0 : i32
    %c0_i32_0 = arith.constant 0 : i32
    %c0_i32_1 = arith.constant 0 : i32
    return %c0_i32, %c0_i32_0 : i32, i32
  }
  func.func @transform_5(%arg0: i32) -> (i32, i32) {
    %c0_i32 = arith.constant 0 : i32
    %c0_i32_0 = arith.constant 0 : i32
    %c0_i32_1 = arith.constant 0 : i32
    return %c0_i32, %c0_i32_0 : i32, i32
  }
  func.func @transform_6(%arg0: i32) -> (i32, i32) {
    %c0_i32 = arith.constant 0 : i32
    %c0_i32_0 = arith.constant 0 : i32
    %c0_i32_1 = arith.constant 0 : i32
    return %c0_i32, %c0_i32_0 : i32, i32
  }
  func.func @transform_7(%arg0: i32) -> (i32, i32) {
    %c0_i32 = arith.constant 0 : i32
    %c0_i32_0 = arith.constant 0 : i32
    %c0_i32_1 = arith.constant 0 : i32
    return %c0_i32, %c0_i32_0 : i32, i32
  }
  func.func @transform_8(%arg0: i32) -> (i32, i32) {
    %c0_i32 = arith.constant 0 : i32
    %c0_i32_0 = arith.constant 0 : i32
    %c0_i32_1 = arith.constant 0 : i32
    return %c0_i32, %c0_i32_0 : i32, i32
  }
  func.func @transform_9(%arg0: i32) -> (i32, i32) {
    %c0_i32 = arith.constant 0 : i32
    %c0_i32_0 = arith.constant 0 : i32
    %c0_i32_1 = arith.constant 0 : i32
    return %c0_i32, %c0_i32_0 : i32, i32
  }
  func.func @transform_10(%arg0: i32) -> (i32, i32) {
    %c0_i32 = arith.constant 0 : i32
    %c0_i32_0 = arith.constant 0 : i32
    %c0_i32_1 = arith.constant 0 : i32
    return %c0_i32, %c0_i32_0 : i32, i32
  }
  func.func @transform_11(%arg0: i32) -> (i32, i32) {
    %c0_i32 = arith.constant 0 : i32
    %c0_i32_0 = arith.constant 0 : i32
    %c0_i32_1 = arith.constant 0 : i32
    return %c0_i32, %c0_i32_0 : i32, i32
  }
  func.func @transform_12(%arg0: i32) -> (i32, i32) {
    %c0_i32 = arith.constant 0 : i32
    %c0_i32_0 = arith.constant 0 : i32
    return %arg0, %c0_i32 : i32, i32
  }
  func.func @transform_13(%arg0: i32) -> (i32, i32) {
    %c0_i32 = arith.constant 0 : i32
    %c0_i32_0 = arith.constant 0 : i32
    return %arg0, %c0_i32 : i32, i32
  }
}

</mosaic_0001>

<llo_original>
// kernel: tpu_custom_call.1
$region0: #{tpu_custom_call.1}
  #allocation0 [shape = 'u32[]', space=smem, size = 0x4, offset = 0x4, fixed_abs, tag = 'smem constant byte address 0x4 - core index']
  #allocation1 [shape = 'u32[72,128]{1,0:T(1,128)}', space=vmem, size = 0x9000, scoped, tag = 'internal scratch']
  %s0 = inlined_call_operand.vmem [shape: f32[8,161], index: 0, kind: input, shape index: {}]
  %s1 = inlined_call_operand.vmem [shape: f32[1,161], index: 1, kind: input, shape index: {}]
  %s2 = inlined_call_operand.hbm [shape: bf16[161,384], index: 2, kind: input, shape index: {}]
  %s3 = inlined_call_operand.vmem [shape: f32[1,384], index: 3, kind: input, shape index: {}]
  %s4 = inlined_call_operand.vmem [shape: bf16[384,384], index: 4, kind: input, shape index: {}]
  %s5 = inlined_call_operand.vmem [shape: f32[1,384], index: 5, kind: input, shape index: {}]
  %s6 = inlined_call_operand.hbm [shape: bf16[384,384], index: 6, kind: input, shape index: {}]
  %s7 = inlined_call_operand.vmem [shape: f32[1,384], index: 7, kind: input, shape index: {}]
  %s8 = inlined_call_operand.hbm [shape: bf16[384,384], index: 8, kind: input, shape index: {}]
  %s9 = inlined_call_operand.vmem [shape: f32[1,384], index: 9, kind: input, shape index: {}]
  %s10 = inlined_call_operand.vmem [shape: bf16[384,161], index: 10, kind: input, shape index: {}]
  %s11 = inlined_call_operand.vmem [shape: f32[1,161], index: 11, kind: input, shape index: {}]
  %s12 = inlined_call_operand.vmem [shape: f32[8,1], index: 12, kind: output, shape index: {0}]
  %s13 = inlined_call_operand.hbm [shape: f32[8,161], index: 13, kind: output, shape index: {1}]
  %14 = xla_tuple %s12, %s13
  %s15 = sld [smem:[#allocation0]]
  $region78: #{tpu_custom_call.1} parent=0
    _
  %s17 = ssub.s32 1, %s15
  %s18 = scalar_select 0, %s17, %s15
  $region1: #{tpu_custom_call.1} parent=0
    #allocation2 [shape = 'u8[129024]{0}', space=vmem, size = 0x1f800, scoped, tag = 'input window, operand 2, single buffered']
    #allocation3 [shape = 's32[1]{0}', space=sflag, size = 0x4, scoped, tag = 'scoped memory for tpu_custom_call.1']
    #allocation4 [shape = 's32[1]{0}', space=sflag, size = 0x4, scoped, tag = 'scoped memory for tpu_custom_call.1']
    #allocation5 [shape = 'u8[294912]{0}', space=vmem, size = 0x48000, scoped, tag = 'input window, operand 6, single buffered']
    #allocation6 [shape = 's32[1]{0}', space=sflag, size = 0x4, scoped, tag = 'scoped memory for tpu_custom_call.1']
    #allocation7 [shape = 'u8[294912]{0}', space=vmem, size = 0x48000, scoped, tag = 'input window, operand 8, single buffered']
    #allocation8 [shape = 'u8[8192]{0}', space=vmem, size = 0x2000, scoped, tag = 'output window, operand 1, single buffered']
    %19 = vsyncpa [#allocation3], 0
    %20 = vsyncpa [#allocation6], 0
    %21 = vsyncpa [#allocation4], 0
    // Predicated region
    $region2: #{tpu_custom_call.1} parent=1 // pred_check
      _
    $region3: #{tpu_custom_call.1} parent=1 // pred_check_branch
      %23 = sbr.rel (0) target = $region5
    $region4: #{tpu_custom_call.1} parent=1 // pred_region
      _
    $region5: #{tpu_custom_call.1} parent=1 // pred_fallthru
      _
    // Predicated region
    $region6: #{tpu_custom_call.1} parent=1 // pred_check
      _
    $region7: #{tpu_custom_call.1} parent=1 // pred_check_branch
      %25 = sbr.rel (0) target = $region9
    $region8: #{tpu_custom_call.1} parent=1 // pred_region
      _
    $region9: #{tpu_custom_call.1} parent=1 // pred_fallthru
      _
    // Predicated region
    $region10: #{tpu_custom_call.1} parent=1 // pred_check
      _
    $region11: #{tpu_custom_call.1} parent=1 // pred_check_branch
      %27 = sbr.rel (0) target = $region13
    $region12: #{tpu_custom_call.1} parent=1 // pred_region
      %29 = vsyncadd [#allocation3], 0
      %s30 = sshll.u32 %s2, 4
      %s31 = int_to_ptr.hbm [resolvable:$true] %s30
      %s32 = sshll.u32 [#allocation2], 4
      %s33 = int_to_ptr.vmem [resolvable:$true] %s32
      %38 = dma.hbm_to_vmem [thread:$0]  %s31, 4032, %s33, [#allocation3], 192, 192, 12
    $region13: #{tpu_custom_call.1} parent=1 // pred_fallthru
      _
    // Predicated region
    $region14: #{tpu_custom_call.1} parent=1 // pred_check
      _
    $region15: #{tpu_custom_call.1} parent=1 // pred_check_branch
      %40 = sbr.rel (0) target = $region17
    $region16: #{tpu_custom_call.1} parent=1 // pred_region
      _
    $region17: #{tpu_custom_call.1} parent=1 // pred_fallthru
      _
    // Predicated region
    $region18: #{tpu_custom_call.1} parent=1 // pred_check
      _
    $region19: #{tpu_custom_call.1} parent=1 // pred_check_branch
      %42 = sbr.rel (0) target = $region21
    $region20: #{tpu_custom_call.1} parent=1 // pred_region
      _
    $region21: #{tpu_custom_call.1} parent=1 // pred_fallthru
      _
    // Predicated region
    $region22: #{tpu_custom_call.1} parent=1 // pred_check
      _
    $region23: #{tpu_custom_call.1} parent=1 // pred_check_branch
      %44 = sbr.rel (0) target = $region25
    $region24: #{tpu_custom_call.1} parent=1 // pred_region
      _
    $region25: #{tpu_custom_call.1} parent=1 // pred_fallthru
      _
    // Predicated region
    $region26: #{tpu_custom_call.1} parent=1 // pred_check
      _
    $region27: #{tpu_custom_call.1} parent=1 // pred_check_branch
      %46 = sbr.rel (0) target = $region29
    $region28: #{tpu_custom_call.1} parent=1 // pred_region
      %48 = vsyncadd [#allocation6], 0
      %s49 = sshll.u32 %s6, 4
      %s50 = int_to_ptr.hbm [resolvable:$true] %s49
      %s51 = sshll.u32 [#allocation5], 4
      %s52 = int_to_ptr.vmem [resolvable:$true] %s51
      %57 = dma.hbm_to_vmem [thread:$0]  %s50, 9216, %s52, [#allocation6], 192, 192, 12
    $region29: #{tpu_custom_call.1} parent=1 // pred_fallthru
      _
    // Predicated region
    $region30: #{tpu_custom_call.1} parent=1 // pred_check
      _
    $region31: #{tpu_custom_call.1} parent=1 // pred_check_branch
      %59 = sbr.rel (0) target = $region33
    $region32: #{tpu_custom_call.1} parent=1 // pred_region
      _
    $region33: #{tpu_custom_call.1} parent=1 // pred_fallthru
      _
    // Predicated region
    $region34: #{tpu_custom_call.1} parent=1 // pred_check
      _
    $region35: #{tpu_custom_call.1} parent=1 // pred_check_branch
      %61 = sbr.rel (0) target = $region37
    $region36: #{tpu_custom_call.1} parent=1 // pred_region
      %63 = vsyncadd [#allocation6], 0
      %s64 = sshll.u32 %s8, 4
      %s65 = int_to_ptr.hbm [resolvable:$true] %s64
      %s66 = sshll.u32 [#allocation7], 4
      %s67 = int_to_ptr.vmem [resolvable:$true] %s66
      %72 = dma.hbm_to_vmem [thread:$0]  %s65, 9216, %s67, [#allocation6], 192, 192, 12
    $region37: #{tpu_custom_call.1} parent=1 // pred_fallthru
      _
    // Predicated region
    $region38: #{tpu_custom_call.1} parent=1 // pred_check
      _
    $region39: #{tpu_custom_call.1} parent=1 // pred_check_branch
      %74 = sbr.rel (0) target = $region41
    $region40: #{tpu_custom_call.1} parent=1 // pred_region
      _
    $region41: #{tpu_custom_call.1} parent=1 // pred_fallthru
      _
    // Predicated region
    $region42: #{tpu_custom_call.1} parent=1 // pred_check
      _
    $region43: #{tpu_custom_call.1} parent=1 // pred_check_branch
      %76 = sbr.rel (0) target = $region45
    $region44: #{tpu_custom_call.1} parent=1 // pred_region
      _
    $region45: #{tpu_custom_call.1} parent=1 // pred_fallthru
      _
    // Predicated region
    $region46: #{tpu_custom_call.1} parent=1 // pred_check
      _
    $region47: #{tpu_custom_call.1} parent=1 // pred_check_branch
      %78 = sbr.rel (0) target = $region49
    $region48: #{tpu_custom_call.1} parent=1 // pred_region
      _
    $region49: #{tpu_custom_call.1} parent=1 // pred_fallthru
      _
    // Predicated region
    $region50: #{tpu_custom_call.1} parent=1 // pred_check
      _
    $region51: #{tpu_custom_call.1} parent=1 // pred_check_branch
      %80 = sbr.rel (0) target = $region53
    $region52: #{tpu_custom_call.1} parent=1 // pred_region
      %82 = dma.done [#allocation3], 4032
    $region53: #{tpu_custom_call.1} parent=1 // pred_fallthru
      _
    // Predicated region
    $region54: #{tpu_custom_call.1} parent=1 // pred_check
      _
    $region55: #{tpu_custom_call.1} parent=1 // pred_check_branch
      %84 = sbr.rel (0) target = $region57
    $region56: #{tpu_custom_call.1} parent=1 // pred_region
      %86 = dma.done [#allocation6], 9216
    $region57: #{tpu_custom_call.1} parent=1 // pred_fallthru
      _
    // Predicated region
    $region58: #{tpu_custom_call.1} parent=1 // pred_check
      _
    $region59: #{tpu_custom_call.1} parent=1 // pred_check_branch
      %88 = sbr.rel (0) target = $region61
    $region60: #{tpu_custom_call.1} parent=1 // pred_region
      %90 = dma.done [#allocation6], 9216
    $region61: #{tpu_custom_call.1} parent=1 // pred_fallthru
      _
    %v92 = vld [vmem:[%s0] sm:$0xff]
    %v93 = vld [vmem:[%s0 + $0x8] sm:$0xff]
    %v94 = vpack.c.bf16 %v92, %v92
    %v95 = vpack.c.bf16 %v93, %v93
    %v96 = vld [vmem:[#allocation2] sm:$0xff]
    %v97 = vld [vmem:[#allocation2 + $0x8] sm:$0xf]
    %v98 = vld [vmem:[#allocation2 + $0xc] sm:$0xff]
    %v99 = vld [vmem:[#allocation2 + $0x14] sm:$0xf]
    %v100 = vld [vmem:[#allocation2 + $0x18] sm:$0xff]
    %v101 = vld [vmem:[#allocation2 + $0x20] sm:$0xf]
    %v102 = vld [vmem:[#allocation2 + $0x24] sm:$0xff]
    %v103 = vld [vmem:[#allocation2 + $0x2c] sm:$0xf]
    %v104 = vld [vmem:[#allocation2 + $0x30] sm:$0xff]
    %v105 = vld [vmem:[#allocation2 + $0x38] sm:$0xf]
    %v106 = vld [vmem:[#allocation2 + $0x3c] sm:$0xff]
    %v107 = vld [vmem:[#allocation2 + $0x44] sm:$0xf]
    %v108 = vld [vmem:[#allocation2 + $0x48] sm:$0xff]
    %v109 = vld [vmem:[#allocation2 + $0x50] sm:$0xf]
    %v110 = vld [vmem:[#allocation2 + $0x54] sm:$0xff]
    %v111 = vld [vmem:[#allocation2 + $0x5c] sm:$0xf]
    %v112 = vld [vmem:[#allocation2 + $0x60] sm:$0xff]
    %v113 = vld [vmem:[#allocation2 + $0x68] sm:$0xf]
    %v114 = vld [vmem:[#allocation2 + $0x6c] sm:$0xff]
    %v115 = vld [vmem:[#allocation2 + $0x74] sm:$0xf]
    %v116 = vld [vmem:[#allocation2 + $0x78] sm:$0xff]
    %v117 = vld [vmem:[#allocation2 + $0x80] sm:$0xf]
    %v118 = vld [vmem:[#allocation2 + $0x84] sm:$0xff]
    %v119 = vld [vmem:[#allocation2 + $0x8c] sm:$0xf]
    %v120 = vld [vmem:[#allocation2 + $0x90] sm:$0xff]
    %v121 = vld [vmem:[#allocation2 + $0x98] sm:$0xf]
    %v122 = vld [vmem:[#allocation2 + $0x9c] sm:$0xff]
    %v123 = vld [vmem:[#allocation2 + $0xa4] sm:$0xf]
    %v124 = vld [vmem:[#allocation2 + $0xa8] sm:$0xff]
    %v125 = vld [vmem:[#allocation2 + $0xb0] sm:$0xf]
    %v126 = vld [vmem:[#allocation2 + $0xb4] sm:$0xff]
    %v127 = vld [vmem:[#allocation2 + $0xbc] sm:$0xf]
    %v128 = vld [vmem:[#allocation2 + $0xc0] sm:$0xff]
    %v129 = vld [vmem:[#allocation2 + $0xc8] sm:$0xf]
    %v130 = vld [vmem:[#allocation2 + $0xcc] sm:$0xff]
    %v131 = vld [vmem:[#allocation2 + $0xd4] sm:$0xf]
    %v132 = vld [vmem:[#allocation2 + $0xd8] sm:$0xff]
    %v133 = vld [vmem:[#allocation2 + $0xe0] sm:$0xf]
    %v134 = vld [vmem:[#allocation2 + $0xe4] sm:$0xff]
    %v135 = vld [vmem:[#allocation2 + $0xec] sm:$0xf]
    %v136 = vld [vmem:[#allocation2 + $0xf0] sm:$0x11]
    %v137 = vld [vmem:[#allocation2 + $0xf8] sm:$0x1]
    %v138 = vld [vmem:[%s3] sm:$0x7]
    %v140 = vperm.slane %v138, 0
    %v141 = vperm.slane %v138, 1
    %v142 = vperm.slane %v138, 2
    %v188 = vunpack.c.l.b16 %v96
    %v189 = vunpack.c.h.b16 %v96
    %v190 = vunpack.c.l.b16 %v97
    %v191 = vunpack.c.l.b16 %v98
    %v192 = vunpack.c.h.b16 %v98
    %v193 = vunpack.c.l.b16 %v99
    %v194 = vunpack.c.l.b16 %v100
    %v195 = vunpack.c.h.b16 %v100
    %v196 = vunpack.c.l.b16 %v101
    %v197 = vunpack.c.l.b16 %v102
    %v198 = vunpack.c.h.b16 %v102
    %v199 = vunpack.c.l.b16 %v103
    %v200 = vunpack.c.l.b16 %v104
    %v201 = vunpack.c.h.b16 %v104
    %v202 = vunpack.c.l.b16 %v105
    %v203 = vunpack.c.l.b16 %v106
    %v204 = vunpack.c.h.b16 %v106
    %v205 = vunpack.c.l.b16 %v107
    %v206 = vunpack.c.l.b16 %v108
    %v207 = vunpack.c.h.b16 %v108
    %v208 = vunpack.c.l.b16 %v109
    %v209 = vunpack.c.l.b16 %v110
    %v210 = vunpack.c.h.b16 %v110
    %v211 = vunpack.c.l.b16 %v111
    %v212 = vunpack.c.l.b16 %v112
    %v213 = vunpack.c.h.b16 %v112
    %v214 = vunpack.c.l.b16 %v113
    %v215 = vunpack.c.l.b16 %v114
    %v216 = vunpack.c.h.b16 %v114
    %v217 = vunpack.c.l.b16 %v115
    %v218 = vunpack.c.l.b16 %v116
    %v219 = vunpack.c.h.b16 %v116
    %v220 = vunpack.c.l.b16 %v117
    %v221 = vunpack.c.l.b16 %v118
    %v222 = vunpack.c.h.b16 %v118
    %v223 = vunpack.c.l.b16 %v119
    %v224 = vunpack.c.l.b16 %v120
    %v225 = vunpack.c.h.b16 %v120
    %v226 = vunpack.c.l.b16 %v121
    %v227 = vunpack.c.l.b16 %v122
    %v228 = vunpack.c.h.b16 %v122
    %v229 = vunpack.c.l.b16 %v123
    %v230 = vunpack.c.l.b16 %v124
    %v231 = vunpack.c.h.b16 %v124
    %v232 = vunpack.c.l.b16 %v125
    %v233 = vunpack.c.l.b16 %v126
    %v234 = vunpack.c.h.b16 %v126
    %v235 = vunpack.c.l.b16 %v127
    %v236 = vunpack.c.l.b16 %v128
    %v237 = vunpack.c.h.b16 %v128
    %v238 = vunpack.c.l.b16 %v129
    %v239 = vunpack.c.l.b16 %v130
    %v240 = vunpack.c.h.b16 %v130
    %v241 = vunpack.c.l.b16 %v131
    %v242 = vunpack.c.l.b16 %v132
    %v243 = vunpack.c.h.b16 %v132
    %v244 = vunpack.c.l.b16 %v133
    %v245 = vunpack.c.l.b16 %v134
    %v246 = vunpack.c.h.b16 %v134
    %v247 = vunpack.c.l.b16 %v135
    %v248 = vunpack.c.l.b16 %v136
    %v249 = vunpack.c.h.b16 %v136
    %v250 = vunpack.c.l.b16 %v137
    %v251 = vpack.c.b16 %v191, %v188
    %v252 = vpack.c.b16 %v192, %v189
    %v253 = vpack.c.b16 %v193, %v190
    %v254 = vpack.c.b16 %v197, %v194
    %v255 = vpack.c.b16 %v198, %v195
    %v256 = vpack.c.b16 %v199, %v196
    %v257 = vpack.c.b16 %v203, %v200
    %v258 = vpack.c.b16 %v204, %v201
    %v259 = vpack.c.b16 %v205, %v202
    %v260 = vpack.c.b16 %v209, %v206
    %v261 = vpack.c.b16 %v210, %v207
    %v262 = vpack.c.b16 %v211, %v208
    %v263 = vpack.c.b16 %v215, %v212
    %v264 = vpack.c.b16 %v216, %v213
    %v265 = vpack.c.b16 %v217, %v214
    %v266 = vpack.c.b16 %v221, %v218
    %v267 = vpack.c.b16 %v222, %v219
    %v268 = vpack.c.b16 %v223, %v220
    %v269 = vpack.c.b16 %v227, %v224
    %v270 = vpack.c.b16 %v228, %v225
    %v271 = vpack.c.b16 %v229, %v226
    %v272 = vpack.c.b16 %v233, %v230
    %v273 = vpack.c.b16 %v234, %v231
    %v274 = vpack.c.b16 %v235, %v232
    %v275 = vpack.c.b16 %v239, %v236
    %v276 = vpack.c.b16 %v240, %v237
    %v277 = vpack.c.b16 %v241, %v238
    %v278 = vpack.c.b16 %v245, %v242
    %v279 = vpack.c.b16 %v246, %v243
    %v280 = vpack.c.b16 %v247, %v244
    %v281 = vpack.c.b16 %v248, %v248
    %v282 = vpack.c.b16 %v249, %v249
    %v283 = vpack.c.b16 %v250, %v250
    %vm314 = vcmask 269312
    %v316 = vsel %vm314, %v95, 0
    %vm318 = vcmask 1040384
    %v319 = vsel 0, 4294967295, 65535
    %v320 = vsel %vm318, %v319, 0
    %v322 = vand.u32 %v281, %v320
    %v325 = vand.u32 %v282, %v320
    %v328 = vand.u32 %v283, %v320
    %330 = vmatpush.bf16.msra.mxu0 %v272
    %331 = vmatpush.bf16.msra.mxu0 %v269
    %332 = vmatpush.bf16.msra.mxu0 %v266
    %333 = vmatpush.bf16.msra.mxu0 %v263
    %334 = vmatpush.bf16.msra.mxu0 %v260
    %335 = vmatpush.bf16.msra.mxu0 %v257
    %336 = vmatpush.bf16.msra.mxu0 %v254
    %337 = vmatpush.bf16.msra.mxu0 %v251
    %338 = vmatmul.bf16.gmra.mxu0 %v94
    %v339 = vpop.f32.mrf.mxu0
    %v340 = vadd.f32 %v140, %v339
    %v341 = vpop.f32.mrf.mxu0
    %342 = vdwg.mxu0
    %343 = vmatpush.bf16.msra.mxu0 0
    %344 = vmatpush.bf16.msra.mxu0 0
    %345 = vmatpush.bf16.msra.mxu0 0
    %346 = vmatpush.bf16.msra.mxu0 0
    %347 = vmatpush.bf16.msra.mxu0 0
    %348 = vmatpush.bf16.msra.mxu0 %v322
    %349 = vmatpush.bf16.msra.mxu0 %v278
    %350 = vmatpush.bf16.msra.mxu0 %v275
    %351 = vmatmul.bf16.gmra.mxu0 %v316
    %v352 = vpop.f32.mrf.mxu0
    %v353 = vadd.f32 %v340, %v352
    %v354 = vpop.f32.mrf.mxu0
    %355 = vdwg.mxu0
    %356 = vmatpush.bf16.msra.mxu0 %v273
    %357 = vmatpush.bf16.msra.mxu0 %v270
    %358 = vmatpush.bf16.msra.mxu0 %v267
    %359 = vmatpush.bf16.msra.mxu0 %v264
    %360 = vmatpush.bf16.msra.mxu0 %v261
    %361 = vmatpush.bf16.msra.mxu0 %v258
    %362 = vmatpush.bf16.msra.mxu0 %v255
    %363 = vmatpush.bf16.msra.mxu0 %v252
    %364 = vmatmul.bf16.gmra.mxu0 %v94
    %v365 = vpop.f32.mrf.mxu0
    %v366 = vadd.f32 %v141, %v365
    %v367 = vpop.f32.mrf.mxu0
    %368 = vdwg.mxu0
    %369 = vmatpush.bf16.msra.mxu0 0
    %370 = vmatpush.bf16.msra.mxu0 0
    %371 = vmatpush.bf16.msra.mxu0 0
    %372 = vmatpush.bf16.msra.mxu0 0
    %373 = vmatpush.bf16.msra.mxu0 0
    %374 = vmatpush.bf16.msra.mxu0 %v325
    %375 = vmatpush.bf16.msra.mxu0 %v279
    %376 = vmatpush.bf16.msra.mxu0 %v276
    %377 = vmatmul.bf16.gmra.mxu0 %v316
    %v378 = vpop.f32.mrf.mxu0
    %v379 = vadd.f32 %v366, %v378
    %v380 = vpop.f32.mrf.mxu0
    %381 = vdwg.mxu0
    %382 = vmatpush.bf16.msra.mxu0 %v274
    %383 = vmatpush.bf16.msra.mxu0 %v271
    %384 = vmatpush.bf16.msra.mxu0 %v268
    %385 = vmatpush.bf16.msra.mxu0 %v265
    %386 = vmatpush.bf16.msra.mxu0 %v262
    %387 = vmatpush.bf16.msra.mxu0 %v259
    %388 = vmatpush.bf16.msra.mxu0 %v256
    %389 = vmatpush.bf16.msra.mxu0 %v253
    %390 = vmatmul.bf16.gmra.mxu0 %v94
    %v391 = vpop.f32.mrf.mxu0
    %v392 = vadd.f32 %v142, %v391
    %v393 = vpop.f32.mrf.mxu0
    %394 = vdwg.mxu0
    %395 = vmatpush.bf16.msra.mxu0 0
    %396 = vmatpush.bf16.msra.mxu0 0
    %397 = vmatpush.bf16.msra.mxu0 0
    %398 = vmatpush.bf16.msra.mxu0 0
    %399 = vmatpush.bf16.msra.mxu0 0
    %400 = vmatpush.bf16.msra.mxu0 %v328
    %401 = vmatpush.bf16.msra.mxu0 %v280
    %402 = vmatpush.bf16.msra.mxu0 %v277
    %403 = vmatmul.bf16.gmra.mxu0 %v316
    %v404 = vpop.f32.mrf.mxu0
    %v405 = vadd.f32 %v392, %v404
    %v406 = vpop.f32.mrf.mxu0
    %407 = vdwg.mxu0
    %v408 = vmax.f32 %v353, 0.0
    %v409 = vmax.f32 %v379, 0.0
    %v410 = vmax.f32 %v405, 0.0
    %v411 = vpack.c.bf16 %v408, %v408
    %v412 = vpack.c.bf16 %v409, %v409
    %v413 = vpack.c.bf16 %v410, %v410
    %v414 = vld [vmem:[%s4] sm:$0xff]
    %v415 = vld [vmem:[%s4 + $0x8] sm:$0xf]
    %v416 = vld [vmem:[%s4 + $0xc] sm:$0xff]
    %v417 = vld [vmem:[%s4 + $0x14] sm:$0xf]
    %v418 = vld [vmem:[%s4 + $0x18] sm:$0xff]
    %v419 = vld [vmem:[%s4 + $0x20] sm:$0xf]
    %v420 = vld [vmem:[%s4 + $0x24] sm:$0xff]
    %v421 = vld [vmem:[%s4 + $0x2c] sm:$0xf]
    %v422 = vld [vmem:[%s4 + $0x30] sm:$0xff]
    %v423 = vld [vmem:[%s4 + $0x38] sm:$0xf]
    %v424 = vld [vmem:[%s4 + $0x3c] sm:$0xff]
    %v425 = vld [vmem:[%s4 + $0x44] sm:$0xf]
    %v426 = vld [vmem:[%s4 + $0x48] sm:$0xff]
    %v427 = vld [vmem:[%s4 + $0x50] sm:$0xf]
    %v428 = vld [vmem:[%s4 + $0x54] sm:$0xff]
    %v429 = vld [vmem:[%s4 + $0x5c] sm:$0xf]
    %v430 = vld [vmem:[%s4 + $0x60] sm:$0xff]
    %v431 = vld [vmem:[%s4 + $0x68] sm:$0xf]
    %v432 = vld [vmem:[%s4 + $0x6c] sm:$0xff]
    %v433 = vld [vmem:[%s4 + $0x74] sm:$0xf]
    %v434 = vld [vmem:[%s4 + $0x78] sm:$0xff]
    %v435 = vld [vmem:[%s4 + $0x80] sm:$0xf]
    %v436 = vld [vmem:[%s4 + $0x84] sm:$0xff]
    %v437 = vld [vmem:[%s4 + $0x8c] sm:$0xf]
    %v438 = vld [vmem:[%s4 + $0x90] sm:$0xff]
    %v439 = vld [vmem:[%s4 + $0x98] sm:$0xf]
    %v440 = vld [vmem:[%s4 + $0x9c] sm:$0xff]
    %v441 = vld [vmem:[%s4 + $0xa4] sm:$0xf]
    %v442 = vld [vmem:[%s4 + $0xa8] sm:$0xff]
    %v443 = vld [vmem:[%s4 + $0xb0] sm:$0xf]
    %v444 = vld [vmem:[%s4 + $0xb4] sm:$0xff]
    %v445 = vld [vmem:[%s4 + $0xbc] sm:$0xf]
    %v446 = vld [vmem:[%s4 + $0xc0] sm:$0xff]
    %v447 = vld [vmem:[%s4 + $0xc8] sm:$0xf]
    %v448 = vld [vmem:[%s4 + $0xcc] sm:$0xff]
    %v449 = vld [vmem:[%s4 + $0xd4] sm:$0xf]
    %v450 = vld [vmem:[%s4 + $0xd8] sm:$0xff]
    %v451 = vld [vmem:[%s4 + $0xe0] sm:$0xf]
    %v452 = vld [vmem:[%s4 + $0xe4] sm:$0xff]
    %v453 = vld [vmem:[%s4 + $0xec] sm:$0xf]
    %v454 = vld [vmem:[%s4 + $0xf0] sm:$0xff]
    %v455 = vld [vmem:[%s4 + $0xf8] sm:$0xf]
    %v456 = vld [vmem:[%s4 + $0xfc] sm:$0xff]
    %v457 = vld [vmem:[%s4 + $0x104] sm:$0xf]
    %v458 = vld [vmem:[%s4 + $0x108] sm:$0xff]
    %v459 = vld [vmem:[%s4 + $0x110] sm:$0xf]
    %v460 = vld [vmem:[%s4 + $0x114] sm:$0xff]
    %v461 = vld [vmem:[%s4 + $0x11c] sm:$0xf]
    %v462 = vld [vmem:[%s4 + $0x120] sm:$0xff]
    %v463 = vld [vmem:[%s4 + $0x128] sm:$0xf]
    %v464 = vld [vmem:[%s4 + $0x12c] sm:$0xff]
    %v465 = vld [vmem:[%s4 + $0x134] sm:$0xf]
    %v466 = vld [vmem:[%s4 + $0x138] sm:$0xff]
    %v467 = vld [vmem:[%s4 + $0x140] sm:$0xf]
    %v468 = vld [vmem:[%s4 + $0x144] sm:$0xff]
    %v469 = vld [vmem:[%s4 + $0x14c] sm:$0xf]
    %v470 = vld [vmem:[%s4 + $0x150] sm:$0xff]
    %v471 = vld [vmem:[%s4 + $0x158] sm:$0xf]
    %v472 = vld [vmem:[%s4 + $0x15c] sm:$0xff]
    %v473 = vld [vmem:[%s4 + $0x164] sm:$0xf]
    %v474 = vld [vmem:[%s4 + $0x168] sm:$0xff]
    %v475 = vld [vmem:[%s4 + $0x170] sm:$0xf]
    %v476 = vld [vmem:[%s4 + $0x174] sm:$0xff]
    %v477 = vld [vmem:[%s4 + $0x17c] sm:$0xf]
    %v478 = vld [vmem:[%s4 + $0x180] sm:$0xff]
    %v479 = vld [vmem:[%s4 + $0x188] sm:$0xf]
    %v480 = vld [vmem:[%s4 + $0x18c] sm:$0xff]
    %v481 = vld [vmem:[%s4 + $0x194] sm:$0xf]
    %v482 = vld [vmem:[%s4 + $0x198] sm:$0xff]
    %v483 = vld [vmem:[%s4 + $0x1a0] sm:$0xf]
    %v484 = vld [vmem:[%s4 + $0x1a4] sm:$0xff]
    %v485 = vld [vmem:[%s4 + $0x1ac] sm:$0xf]
    %v486 = vld [vmem:[%s4 + $0x1b0] sm:$0xff]
    %v487 = vld [vmem:[%s4 + $0x1b8] sm:$0xf]
    %v488 = vld [vmem:[%s4 + $0x1bc] sm:$0xff]
    %v489 = vld [vmem:[%s4 + $0x1c4] sm:$0xf]
    %v490 = vld [vmem:[%s4 + $0x1c8] sm:$0xff]
    %v491 = vld [vmem:[%s4 + $0x1d0] sm:$0xf]
    %v492 = vld [vmem:[%s4 + $0x1d4] sm:$0xff]
    %v493 = vld [vmem:[%s4 + $0x1dc] sm:$0xf]
    %v494 = vld [vmem:[%s4 + $0x1e0] sm:$0xff]
    %v495 = vld [vmem:[%s4 + $0x1e8] sm:$0xf]
    %v496 = vld [vmem:[%s4 + $0x1ec] sm:$0xff]
    %v497 = vld [vmem:[%s4 + $0x1f4] sm:$0xf]
    %v498 = vld [vmem:[%s4 + $0x1f8] sm:$0xff]
    %v499 = vld [vmem:[%s4 + $0x200] sm:$0xf]
    %v500 = vld [vmem:[%s4 + $0x204] sm:$0xff]
    %v501 = vld [vmem:[%s4 + $0x20c] sm:$0xf]
    %v502 = vld [vmem:[%s4 + $0x210] sm:$0xff]
    %v503 = vld [vmem:[%s4 + $0x218] sm:$0xf]
    %v504 = vld [vmem:[%s4 + $0x21c] sm:$0xff]
    %v505 = vld [vmem:[%s4 + $0x224] sm:$0xf]
    %v506 = vld [vmem:[%s4 + $0x228] sm:$0xff]
    %v507 = vld [vmem:[%s4 + $0x230] sm:$0xf]
    %v508 = vld [vmem:[%s4 + $0x234] sm:$0xff]
    %v509 = vld [vmem:[%s4 + $0x23c] sm:$0xf]
    %v510 = vld [vmem:[%s5] sm:$0x7]
    %v512 = vperm.slane %v510, 0
    %v513 = vperm.slane %v510, 1
    %v514 = vperm.slane %v510, 2
    %v614 = vunpack.c.l.b16 %v414
    %v615 = vunpack.c.h.b16 %v414
    %v616 = vunpack.c.l.b16 %v415
    %v617 = vunpack.c.l.b16 %v416
    %v618 = vunpack.c.h.b16 %v416
    %v619 = vunpack.c.l.b16 %v417
    %v620 = vunpack.c.l.b16 %v418
    %v621 = vunpack.c.h.b16 %v418
    %v622 = vunpack.c.l.b16 %v419
    %v623 = vunpack.c.l.b16 %v420
    %v624 = vunpack.c.h.b16 %v420
    %v625 = vunpack.c.l.b16 %v421
    %v626 = vunpack.c.l.b16 %v422
    %v627 = vunpack.c.h.b16 %v422
    %v628 = vunpack.c.l.b16 %v423
    %v629 = vunpack.c.l.b16 %v424
    %v630 = vunpack.c.h.b16 %v424
    %v631 = vunpack.c.l.b16 %v425
    %v632 = vunpack.c.l.b16 %v426
    %v633 = vunpack.c.h.b16 %v426
    %v634 = vunpack.c.l.b16 %v427
    %v635 = vunpack.c.l.b16 %v428
    %v636 = vunpack.c.h.b16 %v428
    %v637 = vunpack.c.l.b16 %v429
    %v638 = vunpack.c.l.b16 %v430
    %v639 = vunpack.c.h.b16 %v430
    %v640 = vunpack.c.l.b16 %v431
    %v641 = vunpack.c.l.b16 %v432
    %v642 = vunpack.c.h.b16 %v432
    %v643 = vunpack.c.l.b16 %v433
    %v644 = vunpack.c.l.b16 %v434
    %v645 = vunpack.c.h.b16 %v434
    %v646 = vunpack.c.l.b16 %v435
    %v647 = vunpack.c.l.b16 %v436
    %v648 = vunpack.c.h.b16 %v436
    %v649 = vunpack.c.l.b16 %v437
    %v650 = vunpack.c.l.b16 %v438
    %v651 = vunpack.c.h.b16 %v438
    %v652 = vunpack.c.l.b16 %v439
    %v653 = vunpack.c.l.b16 %v440
    %v654 = vunpack.c.h.b16 %v440
    %v655 = vunpack.c.l.b16 %v441
    %v656 = vunpack.c.l.b16 %v442
    %v657 = vunpack.c.h.b16 %v442
    %v658 = vunpack.c.l.b16 %v443
    %v659 = vunpack.c.l.b16 %v444
    %v660 = vunpack.c.h.b16 %v444
    %v661 = vunpack.c.l.b16 %v445
    %v662 = vunpack.c.l.b16 %v446
    %v663 = vunpack.c.h.b16 %v446
    %v664 = vunpack.c.l.b16 %v447
    %v665 = vunpack.c.l.b16 %v448
    %v666 = vunpack.c.h.b16 %v448
    %v667 = vunpack.c.l.b16 %v449
    %v668 = vunpack.c.l.b16 %v450
    %v669 = vunpack.c.h.b16 %v450
    %v670 = vunpack.c.l.b16 %v451
    %v671 = vunpack.c.l.b16 %v452
    %v672 = vunpack.c.h.b16 %v452
    %v673 = vunpack.c.l.b16 %v453
    %v674 = vunpack.c.l.b16 %v454
    %v675 = vunpack.c.h.b16 %v454
    %v676 = vunpack.c.l.b16 %v455
    %v677 = vunpack.c.l.b16 %v456
    %v678 = vunpack.c.h.b16 %v456
    %v679 = vunpack.c.l.b16 %v457
    %v680 = vunpack.c.l.b16 %v458
    %v681 = vunpack.c.h.b16 %v458
    %v682 = vunpack.c.l.b16 %v459
    %v683 = vunpack.c.l.b16 %v460
    %v684 = vunpack.c.h.b16 %v460
    %v685 = vunpack.c.l.b16 %v461
    %v686 = vunpack.c.l.b16 %v462
    %v687 = vunpack.c.h.b16 %v462
    %v688 = vunpack.c.l.b16 %v463
    %v689 = vunpack.c.l.b16 %v464
    %v690 = vunpack.c.h.b16 %v464
    %v691 = vunpack.c.l.b16 %v465
    %v692 = vunpack.c.l.b16 %v466
    %v693 = vunpack.c.h.b16 %v466
    %v694 = vunpack.c.l.b16 %v467
    %v695 = vunpack.c.l.b16 %v468
    %v696 = vunpack.c.h.b16 %v468
    %v697 = vunpack.c.l.b16 %v469
    %v698 = vunpack.c.l.b16 %v470
    %v699 = vunpack.c.h.b16 %v470
    %v700 = vunpack.c.l.b16 %v471
    %v701 = vunpack.c.l.b16 %v472
    %v702 = vunpack.c.h.b16 %v472
    %v703 = vunpack.c.l.b16 %v473
    %v704 = vunpack.c.l.b16 %v474
    %v705 = vunpack.c.h.b16 %v474
    %v706 = vunpack.c.l.b16 %v475
    %v707 = vunpack.c.l.b16 %v476
    %v708 = vunpack.c.h.b16 %v476
    %v709 = vunpack.c.l.b16 %v477
    %v710 = vunpack.c.l.b16 %v478
    %v711 = vunpack.c.h.b16 %v478
    %v712 = vunpack.c.l.b16 %v479
    %v713 = vunpack.c.l.b16 %v480
    %v714 = vunpack.c.h.b16 %v480
    %v715 = vunpack.c.l.b16 %v481
    %v716 = vunpack.c.l.b16 %v482
    %v717 = vunpack.c.h.b16 %v482
    %v718 = vunpack.c.l.b16 %v483
    %v719 = vunpack.c.l.b16 %v484
    %v720 = vunpack.c.h.b16 %v484
    %v721 = vunpack.c.l.b16 %v485
    %v722 = vunpack.c.l.b16 %v486
    %v723 = vunpack.c.h.b16 %v486
    %v724 = vunpack.c.l.b16 %v487
    %v725 = vunpack.c.l.b16 %v488
    %v726 = vunpack.c.h.b16 %v488
    %v727 = vunpack.c.l.b16 %v489
    %v728 = vunpack.c.l.b16 %v490
    %v729 = vunpack.c.h.b16 %v490
    %v730 = vunpack.c.l.b16 %v491
    %v731 = vunpack.c.l.b16 %v492
    %v732 = vunpack.c.h.b16 %v492
    %v733 = vunpack.c.l.b16 %v493
    %v734 = vunpack.c.l.b16 %v494
    %v735 = vunpack.c.h.b16 %v494
    %v736 = vunpack.c.l.b16 %v495
    %v737 = vunpack.c.l.b16 %v496
    %v738 = vunpack.c.h.b16 %v496
    %v739 = vunpack.c.l.b16 %v497
    %v740 = vunpack.c.l.b16 %v498
    %v741 = vunpack.c.h.b16 %v498
    %v742 = vunpack.c.l.b16 %v499
    %v743 = vunpack.c.l.b16 %v500
    %v744 = vunpack.c.h.b16 %v500
    %v745 = vunpack.c.l.b16 %v501
    %v746 = vunpack.c.l.b16 %v502
    %v747 = vunpack.c.h.b16 %v502
    %v748 = vunpack.c.l.b16 %v503
    %v749 = vunpack.c.l.b16 %v504
    %v750 = vunpack.c.h.b16 %v504
    %v751 = vunpack.c.l.b16 %v505
    %v752 = vunpack.c.l.b16 %v506
    %v753 = vunpack.c.h.b16 %v506
    %v754 = vunpack.c.l.b16 %v507
    %v755 = vunpack.c.l.b16 %v508
    %v756 = vunpack.c.h.b16 %v508
    %v757 = vunpack.c.l.b16 %v509
    %v758 = vpack.c.b16 %v617, %v614
    %v759 = vpack.c.b16 %v618, %v615
    %v760 = vpack.c.b16 %v619, %v616
    %v761 = vpack.c.b16 %v623, %v620
    %v762 = vpack.c.b16 %v624, %v621
    %v763 = vpack.c.b16 %v625, %v622
    %v764 = vpack.c.b16 %v629, %v626
    %v765 = vpack.c.b16 %v630, %v627
    %v766 = vpack.c.b16 %v631, %v628
    %v767 = vpack.c.b16 %v635, %v632
    %v768 = vpack.c.b16 %v636, %v633
    %v769 = vpack.c.b16 %v637, %v634
    %v770 = vpack.c.b16 %v641, %v638
    %v771 = vpack.c.b16 %v642, %v639
    %v772 = vpack.c.b16 %v643, %v640
    %v773 = vpack.c.b16 %v647, %v644
    %v774 = vpack.c.b16 %v648, %v645
    %v775 = vpack.c.b16 %v649, %v646
    %v776 = vpack.c.b16 %v653, %v650
    %v777 = vpack.c.b16 %v654, %v651
    %v778 = vpack.c.b16 %v655, %v652
    %v779 = vpack.c.b16 %v659, %v656
    %v780 = vpack.c.b16 %v660, %v657
    %v781 = vpack.c.b16 %v661, %v658
    %v782 = vpack.c.b16 %v665, %v662
    %v783 = vpack.c.b16 %v666, %v663
    %v784 = vpack.c.b16 %v667, %v664
    %v785 = vpack.c.b16 %v671, %v668
    %v786 = vpack.c.b16 %v672, %v669
    %v787 = vpack.c.b16 %v673, %v670
    %v788 = vpack.c.b16 %v677, %v674
    %v789 = vpack.c.b16 %v678, %v675
    %v790 = vpack.c.b16 %v679, %v676
    %v791 = vpack.c.b16 %v683, %v680
    %v792 = vpack.c.b16 %v684, %v681
    %v793 = vpack.c.b16 %v685, %v682
    %v794 = vpack.c.b16 %v689, %v686
    %v795 = vpack.c.b16 %v690, %v687
    %v796 = vpack.c.b16 %v691, %v688
    %v797 = vpack.c.b16 %v695, %v692
    %v798 = vpack.c.b16 %v696, %v693
    %v799 = vpack.c.b16 %v697, %v694
    %v800 = vpack.c.b16 %v701, %v698
    %v801 = vpack.c.b16 %v702, %v699
    %v802 = vpack.c.b16 %v703, %v700
    %v803 = vpack.c.b16 %v707, %v704
    %v804 = vpack.c.b16 %v708, %v705
    %v805 = vpack.c.b16 %v709, %v706
    %v806 = vpack.c.b16 %v713, %v710
    %v807 = vpack.c.b16 %v714, %v711
    %v808 = vpack.c.b16 %v715, %v712
    %v809 = vpack.c.b16 %v719, %v716
    %v810 = vpack.c.b16 %v720, %v717
    %v811 = vpack.c.b16 %v721, %v718
    %v812 = vpack.c.b16 %v725, %v722
    %v813 = vpack.c.b16 %v726, %v723
    %v814 = vpack.c.b16 %v727, %v724
    %v815 = vpack.c.b16 %v731, %v728
    %v816 = vpack.c.b16 %v732, %v729
    %v817 = vpack.c.b16 %v733, %v730
    %v818 = vpack.c.b16 %v737, %v734
    %v819 = vpack.c.b16 %v738, %v735
    %v820 = vpack.c.b16 %v739, %v736
    %v821 = vpack.c.b16 %v743, %v740
    %v822 = vpack.c.b16 %v744, %v741
    %v823 = vpack.c.b16 %v745, %v742
    %v824 = vpack.c.b16 %v749, %v746
    %v825 = vpack.c.b16 %v750, %v747
    %v826 = vpack.c.b16 %v751, %v748
    %v827 = vpack.c.b16 %v755, %v752
    %v828 = vpack.c.b16 %v756, %v753
    %v829 = vpack.c.b16 %v757, %v754
    %902 = vmatpush.bf16.msra.mxu0 %v779
    %903 = vmatpush.bf16.msra.mxu0 %v776
    %904 = vmatpush.bf16.msra.mxu0 %v773
    %905 = vmatpush.bf16.msra.mxu0 %v770
    %906 = vmatpush.bf16.msra.mxu0 %v767
    %907 = vmatpush.bf16.msra.mxu0 %v764
    %908 = vmatpush.bf16.msra.mxu0 %v761
    %909 = vmatpush.bf16.msra.mxu0 %v758
    %910 = vmatmul.bf16.gmra.mxu0 %v411
    %v911 = vpop.f32.mrf.mxu0
    %v912 = vadd.f32 %v512, %v911
    %v913 = vpop.f32.mrf.mxu0
    %914 = vdwg.mxu0
    %915 = vmatpush.bf16.msra.mxu0 %v803
    %916 = vmatpush.bf16.msra.mxu0 %v800
    %917 = vmatpush.bf16.msra.mxu0 %v797
    %918 = vmatpush.bf16.msra.mxu0 %v794
    %919 = vmatpush.bf16.msra.mxu0 %v791
    %920 = vmatpush.bf16.msra.mxu0 %v788
    %921 = vmatpush.bf16.msra.mxu0 %v785
    %922 = vmatpush.bf16.msra.mxu0 %v782
    %923 = vmatmul.bf16.gmra.mxu0 %v412
    %v924 = vpop.f32.mrf.mxu0
    %v925 = vadd.f32 %v912, %v924
    %v926 = vpop.f32.mrf.mxu0
    %927 = vdwg.mxu0
    %928 = vmatpush.bf16.msra.mxu0 %v827
    %929 = vmatpush.bf16.msra.mxu0 %v824
    %930 = vmatpush.bf16.msra.mxu0 %v821
    %931 = vmatpush.bf16.msra.mxu0 %v818
    %932 = vmatpush.bf16.msra.mxu0 %v815
    %933 = vmatpush.bf16.msra.mxu0 %v812
    %934 = vmatpush.bf16.msra.mxu0 %v809
    %935 = vmatpush.bf16.msra.mxu0 %v806
    %936 = vmatmul.bf16.gmra.mxu0 %v413
    %v937 = vpop.f32.mrf.mxu0
    %v938 = vadd.f32 %v925, %v937
    %v939 = vpop.f32.mrf.mxu0
    %940 = vdwg.mxu0
    %941 = vmatpush.bf16.msra.mxu0 %v780
    %942 = vmatpush.bf16.msra.mxu0 %v777
    %943 = vmatpush.bf16.msra.mxu0 %v774
    %944 = vmatpush.bf16.msra.mxu0 %v771
    %945 = vmatpush.bf16.msra.mxu0 %v768
    %946 = vmatpush.bf16.msra.mxu0 %v765
    %947 = vmatpush.bf16.msra.mxu0 %v762
    %948 = vmatpush.bf16.msra.mxu0 %v759
    %949 = vmatmul.bf16.gmra.mxu0 %v411
    %v950 = vpop.f32.mrf.mxu0
    %v951 = vadd.f32 %v513, %v950
    %v952 = vpop.f32.mrf.mxu0
    %953 = vdwg.mxu0
    %954 = vmatpush.bf16.msra.mxu0 %v804
    %955 = vmatpush.bf16.msra.mxu0 %v801
    %956 = vmatpush.bf16.msra.mxu0 %v798
    %957 = vmatpush.bf16.msra.mxu0 %v795
    %958 = vmatpush.bf16.msra.mxu0 %v792
    %959 = vmatpush.bf16.msra.mxu0 %v789
    %960 = vmatpush.bf16.msra.mxu0 %v786
    %961 = vmatpush.bf16.msra.mxu0 %v783
    %962 = vmatmul.bf16.gmra.mxu0 %v412
    %v963 = vpop.f32.mrf.mxu0
    %v964 = vadd.f32 %v951, %v963
    %v965 = vpop.f32.mrf.mxu0
    %966 = vdwg.mxu0
    %967 = vmatpush.bf16.msra.mxu0 %v828
    %968 = vmatpush.bf16.msra.mxu0 %v825
    %969 = vmatpush.bf16.msra.mxu0 %v822
    %970 = vmatpush.bf16.msra.mxu0 %v819
    %971 = vmatpush.bf16.msra.mxu0 %v816
    %972 = vmatpush.bf16.msra.mxu0 %v813
    %973 = vmatpush.bf16.msra.mxu0 %v810
    %974 = vmatpush.bf16.msra.mxu0 %v807
    %975 = vmatmul.bf16.gmra.mxu0 %v413
    %v976 = vpop.f32.mrf.mxu0
    %v977 = vadd.f32 %v964, %v976
    %v978 = vpop.f32.mrf.mxu0
    %979 = vdwg.mxu0
    %980 = vmatpush.bf16.msra.mxu0 %v781
    %981 = vmatpush.bf16.msra.mxu0 %v778
    %982 = vmatpush.bf16.msra.mxu0 %v775
    %983 = vmatpush.bf16.msra.mxu0 %v772
    %984 = vmatpush.bf16.msra.mxu0 %v769
    %985 = vmatpush.bf16.msra.mxu0 %v766
    %986 = vmatpush.bf16.msra.mxu0 %v763
    %987 = vmatpush.bf16.msra.mxu0 %v760
    %988 = vmatmul.bf16.gmra.mxu0 %v411
    %v989 = vpop.f32.mrf.mxu0
    %v990 = vadd.f32 %v514, %v989
    %v991 = vpop.f32.mrf.mxu0
    %992 = vdwg.mxu0
    %993 = vmatpush.bf16.msra.mxu0 %v805
    %994 = vmatpush.bf16.msra.mxu0 %v802
    %995 = vmatpush.bf16.msra.mxu0 %v799
    %996 = vmatpush.bf16.msra.mxu0 %v796
    %997 = vmatpush.bf16.msra.mxu0 %v793
    %998 = vmatpush.bf16.msra.mxu0 %v790
    %999 = vmatpush.bf16.msra.mxu0 %v787
    %1000 = vmatpush.bf16.msra.mxu0 %v784
    %1001 = vmatmul.bf16.gmra.mxu0 %v412
    %v1002 = vpop.f32.mrf.mxu0
    %v1003 = vadd.f32 %v990, %v1002
    %v1004 = vpop.f32.mrf.mxu0
    %1005 = vdwg.mxu0
    %1006 = vmatpush.bf16.msra.mxu0 %v829
    %1007 = vmatpush.bf16.msra.mxu0 %v826
    %1008 = vmatpush.bf16.msra.mxu0 %v823
    %1009 = vmatpush.bf16.msra.mxu0 %v820
    %1010 = vmatpush.bf16.msra.mxu0 %v817
    %1011 = vmatpush.bf16.msra.mxu0 %v814
    %1012 = vmatpush.bf16.msra.mxu0 %v811
    %1013 = vmatpush.bf16.msra.mxu0 %v808
    %1014 = vmatmul.bf16.gmra.mxu0 %v413
    %v1015 = vpop.f32.mrf.mxu0
    %v1016 = vadd.f32 %v1003, %v1015
    %v1017 = vpop.f32.mrf.mxu0
    %1018 = vdwg.mxu0
    %v1019 = vmax.f32 %v938, 0.0
    %v1020 = vmax.f32 %v977, 0.0
    %v1021 = vmax.f32 %v1016, 0.0
    %v1022 = vpack.c.bf16 %v1019, %v1019
    %v1023 = vpack.c.bf16 %v1020, %v1020
    %v1024 = vpack.c.bf16 %v1021, %v1021
    %v1025 = vld [vmem:[#allocation5] sm:$0xff]
    %v1026 = vld [vmem:[#allocation5 + $0x8] sm:$0xf]
    %v1027 = vld [vmem:[#allocation5 + $0xc] sm:$0xff]
    %v1028 = vld [vmem:[#allocation5 + $0x14] sm:$0xf]
    %v1029 = vld [vmem:[#allocation5 + $0x18] sm:$0xff]
    %v1030 = vld [vmem:[#allocation5 + $0x20] sm:$0xf]
    %v1031 = vld [vmem:[#allocation5 + $0x24] sm:$0xff]
    %v1032 = vld [vmem:[#allocation5 + $0x2c] sm:$0xf]
    %v1033 = vld [vmem:[#allocation5 + $0x30] sm:$0xff]
    %v1034 = vld [vmem:[#allocation5 + $0x38] sm:$0xf]
    %v1035 = vld [vmem:[#allocation5 + $0x3c] sm:$0xff]
    %v1036 = vld [vmem:[#allocation5 + $0x44] sm:$0xf]
    %v1037 = vld [vmem:[#allocation5 + $0x48] sm:$0xff]
    %v1038 = vld [vmem:[#allocation5 + $0x50] sm:$0xf]
    %v1039 = vld [vmem:[#allocation5 + $0x54] sm:$0xff]
    %v1040 = vld [vmem:[#allocation5 + $0x5c] sm:$0xf]
    %v1041 = vld [vmem:[#allocation5 + $0x60] sm:$0xff]
    %v1042 = vld [vmem:[#allocation5 + $0x68] sm:$0xf]
    %v1043 = vld [vmem:[#allocation5 + $0x6c] sm:$0xff]
    %v1044 = vld [vmem:[#allocation5 + $0x74] sm:$0xf]
    %v1045 = vld [vmem:[#allocation5 + $0x78] sm:$0xff]
    %v1046 = vld [vmem:[#allocation5 + $0x80] sm:$0xf]
    %v1047 = vld [vmem:[#allocation5 + $0x84] sm:$0xff]
    %v1048 = vld [vmem:[#allocation5 + $0x8c] sm:$0xf]
    %v1049 = vld [vmem:[#allocation5 + $0x90] sm:$0xff]
    %v1050 = vld [vmem:[#allocation5 + $0x98] sm:$0xf]
    %v1051 = vld [vmem:[#allocation5 + $0x9c] sm:$0xff]
    %v1052 = vld [vmem:[#allocation5 + $0xa4] sm:$0xf]
    %v1053 = vld [vmem:[#allocation5 + $0xa8] sm:$0xff]
    %v1054 = vld [vmem:[#allocation5 + $0xb0] sm:$0xf]
    %v1055 = vld [vmem:[#allocation5 + $0xb4] sm:$0xff]
    %v1056 = vld [vmem:[#allocation5 + $0xbc] sm:$0xf]
    %v1057 = vld [vmem:[#allocation5 + $0xc0] sm:$0xff]
    %v1058 = vld [vmem:[#allocation5 + $0xc8] sm:$0xf]
    %v1059 = vld [vmem:[#allocation5 + $0xcc] sm:$0xff]
    %v1060 = vld [vmem:[#allocation5 + $0xd4] sm:$0xf]
    %v1061 = vld [vmem:[#allocation5 + $0xd8] sm:$0xff]
    %v1062 = vld [vmem:[#allocation5 + $0xe0] sm:$0xf]
    %v1063 = vld [vmem:[#allocation5 + $0xe4] sm:$0xff]
    %v1064 = vld [vmem:[#allocation5 + $0xec] sm:$0xf]
    %v1065 = vld [vmem:[#allocation5 + $0xf0] sm:$0xff]
    %v1066 = vld [vmem:[#allocation5 + $0xf8] sm:$0xf]
    %v1067 = vld [vmem:[#allocation5 + $0xfc] sm:$0xff]
    %v1068 = vld [vmem:[#allocation5 + $0x104] sm:$0xf]
    %v1069 = vld [vmem:[#allocation5 + $0x108] sm:$0xff]
    %v1070 = vld [vmem:[#allocation5 + $0x110] sm:$0xf]
    %v1071 = vld [vmem:[#allocation5 + $0x114] sm:$0xff]
    %v1072 = vld [vmem:[#allocation5 + $0x11c] sm:$0xf]
    %v1073 = vld [vmem:[#allocation5 + $0x120] sm:$0xff]
    %v1074 = vld [vmem:[#allocation5 + $0x128] sm:$0xf]
    %v1075 = vld [vmem:[#allocation5 + $0x12c] sm:$0xff]
    %v1076 = vld [vmem:[#allocation5 + $0x134] sm:$0xf]
    %v1077 = vld [vmem:[#allocation5 + $0x138] sm:$0xff]
    %v1078 = vld [vmem:[#allocation5 + $0x140] sm:$0xf]
    %v1079 = vld [vmem:[#allocation5 + $0x144] sm:$0xff]
    %v1080 = vld [vmem:[#allocation5 + $0x14c] sm:$0xf]
    %v1081 = vld [vmem:[#allocation5 + $0x150] sm:$0xff]
    %v1082 = vld [vmem:[#allocation5 + $0x158] sm:$0xf]
    %v1083 = vld [vmem:[#allocation5 + $0x15c] sm:$0xff]
    %v1084 = vld [vmem:[#allocation5 + $0x164] sm:$0xf]
    %v1085 = vld [vmem:[#allocation5 + $0x168] sm:$0xff]
    %v1086 = vld [vmem:[#allocation5 + $0x170] sm:$0xf]
    %v1087 = vld [vmem:[#allocation5 + $0x174] sm:$0xff]
    %v1088 = vld [vmem:[#allocation5 + $0x17c] sm:$0xf]
    %v1089 = vld [vmem:[#allocation5 + $0x180] sm:$0xff]
    %v1090 = vld [vmem:[#allocation5 + $0x188] sm:$0xf]
    %v1091 = vld [vmem:[#allocation5 + $0x18c] sm:$0xff]
    %v1092 = vld [vmem:[#allocation5 + $0x194] sm:$0xf]
    %v1093 = vld [vmem:[#allocation5 + $0x198] sm:$0xff]
    %v1094 = vld [vmem:[#allocation5 + $0x1a0] sm:$0xf]
    %v1095 = vld [vmem:[#allocation5 + $0x1a4] sm:$0xff]
    %v1096 = vld [vmem:[#allocation5 + $0x1ac] sm:$0xf]
    %v1097 = vld [vmem:[#allocation5 + $0x1b0] sm:$0xff]
    %v1098 = vld [vmem:[#allocation5 + $0x1b8] sm:$0xf]
    %v1099 = vld [vmem:[#allocation5 + $0x1bc] sm:$0xff]
    %v1100 = vld [vmem:[#allocation5 + $0x1c4] sm:$0xf]
    %v1101 = vld [vmem:[#allocation5 + $0x1c8] sm:$0xff]
    %v1102 = vld [vmem:[#allocation5 + $0x1d0] sm:$0xf]
    %v1103 = vld [vmem:[#allocation5 + $0x1d4] sm:$0xff]
    %v1104 = vld [vmem:[#allocation5 + $0x1dc] sm:$0xf]
    %v1105 = vld [vmem:[#allocation5 + $0x1e0] sm:$0xff]
    %v1106 = vld [vmem:[#allocation5 + $0x1e8] sm:$0xf]
    %v1107 = vld [vmem:[#allocation5 + $0x1ec] sm:$0xff]
    %v1108 = vld [vmem:[#allocation5 + $0x1f4] sm:$0xf]
    %v1109 = vld [vmem:[#allocation5 + $0x1f8] sm:$0xff]
    %v1110 = vld [vmem:[#allocation5 + $0x200] sm:$0xf]
    %v1111 = vld [vmem:[#allocation5 + $0x204] sm:$0xff]
    %v1112 = vld [vmem:[#allocation5 + $0x20c] sm:$0xf]
    %v1113 = vld [vmem:[#allocation5 + $0x210] sm:$0xff]
    %v1114 = vld [vmem:[#allocation5 + $0x218] sm:$0xf]
    %v1115 = vld [vmem:[#allocation5 + $0x21c] sm:$0xff]
    %v1116 = vld [vmem:[#allocation5 + $0x224] sm:$0xf]
    %v1117 = vld [vmem:[#allocation5 + $0x228] sm:$0xff]
    %v1118 = vld [vmem:[#allocation5 + $0x230] sm:$0xf]
    %v1119 = vld [vmem:[#allocation5 + $0x234] sm:$0xff]
    %v1120 = vld [vmem:[#allocation5 + $0x23c] sm:$0xf]
    %v1121 = vld [vmem:[%s7] sm:$0x7]
    %v1123 = vperm.slane %v1121, 0
    %v1124 = vperm.slane %v1121, 1
    %v1125 = vperm.slane %v1121, 2
    %v1225 = vunpack.c.l.b16 %v1025
    %v1226 = vunpack.c.h.b16 %v1025
    %v1227 = vunpack.c.l.b16 %v1026
    %v1228 = vunpack.c.l.b16 %v1027
    %v1229 = vunpack.c.h.b16 %v1027
    %v1230 = vunpack.c.l.b16 %v1028
    %v1231 = vunpack.c.l.b16 %v1029
    %v1232 = vunpack.c.h.b16 %v1029
    %v1233 = vunpack.c.l.b16 %v1030
    %v1234 = vunpack.c.l.b16 %v1031
    %v1235 = vunpack.c.h.b16 %v1031
    %v1236 = vunpack.c.l.b16 %v1032
    %v1237 = vunpack.c.l.b16 %v1033
    %v1238 = vunpack.c.h.b16 %v1033
    %v1239 = vunpack.c.l.b16 %v1034
    %v1240 = vunpack.c.l.b16 %v1035
    %v1241 = vunpack.c.h.b16 %v1035
    %v1242 = vunpack.c.l.b16 %v1036
    %v1243 = vunpack.c.l.b16 %v1037
    %v1244 = vunpack.c.h.b16 %v1037
    %v1245 = vunpack.c.l.b16 %v1038
    %v1246 = vunpack.c.l.b16 %v1039
    %v1247 = vunpack.c.h.b16 %v1039
    %v1248 = vunpack.c.l.b16 %v1040
    %v1249 = vunpack.c.l.b16 %v1041
    %v1250 = vunpack.c.h.b16 %v1041
    %v1251 = vunpack.c.l.b16 %v1042
    %v1252 = vunpack.c.l.b16 %v1043
    %v1253 = vunpack.c.h.b16 %v1043
    %v1254 = vunpack.c.l.b16 %v1044
    %v1255 = vunpack.c.l.b16 %v1045
    %v1256 = vunpack.c.h.b16 %v1045
    %v1257 = vunpack.c.l.b16 %v1046
    %v1258 = vunpack.c.l.b16 %v1047
    %v1259 = vunpack.c.h.b16 %v1047
    %v1260 = vunpack.c.l.b16 %v1048
    %v1261 = vunpack.c.l.b16 %v1049
    %v1262 = vunpack.c.h.b16 %v1049
    %v1263 = vunpack.c.l.b16 %v1050
    %v1264 = vunpack.c.l.b16 %v1051
    %v1265 = vunpack.c.h.b16 %v1051
    %v1266 = vunpack.c.l.b16 %v1052
    %v1267 = vunpack.c.l.b16 %v1053
    %v1268 = vunpack.c.h.b16 %v1053
    %v1269 = vunpack.c.l.b16 %v1054
    %v1270 = vunpack.c.l.b16 %v1055
    %v1271 = vunpack.c.h.b16 %v1055
    %v1272 = vunpack.c.l.b16 %v1056
    %v1273 = vunpack.c.l.b16 %v1057
    %v1274 = vunpack.c.h.b16 %v1057
    %v1275 = vunpack.c.l.b16 %v1058
    %v1276 = vunpack.c.l.b16 %v1059
    %v1277 = vunpack.c.h.b16 %v1059
    %v1278 = vunpack.c.l.b16 %v1060
    %v1279 = vunpack.c.l.b16 %v1061
    %v1280 = vunpack.c.h.b16 %v1061
    %v1281 = vunpack.c.l.b16 %v1062
    %v1282 = vunpack.c.l.b16 %v1063
    %v1283 = vunpack.c.h.b16 %v1063
    %v1284 = vunpack.c.l.b16 %v1064
    %v1285 = vunpack.c.l.b16 %v1065
    %v1286 = vunpack.c.h.b16 %v1065
    %v1287 = vunpack.c.l.b16 %v1066
    %v1288 = vunpack.c.l.b16 %v1067
    %v1289 = vunpack.c.h.b16 %v1067
    %v1290 = vunpack.c.l.b16 %v1068
    %v1291 = vunpack.c.l.b16 %v1069
    %v1292 = vunpack.c.h.b16 %v1069
    %v1293 = vunpack.c.l.b16 %v1070
    %v1294 = vunpack.c.l.b16 %v1071
    %v1295 = vunpack.c.h.b16 %v1071
    %v1296 = vunpack.c.l.b16 %v1072
    %v1297 = vunpack.c.l.b16 %v1073
    %v1298 = vunpack.c.h.b16 %v1073
    %v1299 = vunpack.c.l.b16 %v1074
    %v1300 = vunpack.c.l.b16 %v1075
    %v1301 = vunpack.c.h.b16 %v1075
    %v1302 = vunpack.c.l.b16 %v1076
    %v1303 = vunpack.c.l.b16 %v1077
    %v1304 = vunpack.c.h.b16 %v1077
    %v1305 = vunpack.c.l.b16 %v1078
    %v1306 = vunpack.c.l.b16 %v1079
    %v1307 = vunpack.c.h.b16 %v1079
    %v1308 = vunpack.c.l.b16 %v1080
    %v1309 = vunpack.c.l.b16 %v1081
    %v1310 = vunpack.c.h.b16 %v1081
    %v1311 = vunpack.c.l.b16 %v1082
    %v1312 = vunpack.c.l.b16 %v1083
    %v1313 = vunpack.c.h.b16 %v1083
    %v1314 = vunpack.c.l.b16 %v1084
    %v1315 = vunpack.c.l.b16 %v1085
    %v1316 = vunpack.c.h.b16 %v1085
    %v1317 = vunpack.c.l.b16 %v1086
    %v1318 = vunpack.c.l.b16 %v1087
    %v1319 = vunpack.c.h.b16 %v1087
    %v1320 = vunpack.c.l.b16 %v1088
    %v1321 = vunpack.c.l.b16 %v1089
    %v1322 = vunpack.c.h.b16 %v1089
    %v1323 = vunpack.c.l.b16 %v1090
    %v1324 = vunpack.c.l.b16 %v1091
    %v1325 = vunpack.c.h.b16 %v1091
    %v1326 = vunpack.c.l.b16 %v1092
    %v1327 = vunpack.c.l.b16 %v1093
    %v1328 = vunpack.c.h.b16 %v1093
    %v1329 = vunpack.c.l.b16 %v1094
    %v1330 = vunpack.c.l.b16 %v1095
    %v1331 = vunpack.c.h.b16 %v1095
    %v1332 = vunpack.c.l.b16 %v1096
    %v1333 = vunpack.c.l.b16 %v1097
    %v1334 = vunpack.c.h.b16 %v1097
    %v1335 = vunpack.c.l.b16 %v1098
    %v1336 = vunpack.c.l.b16 %v1099
    %v1337 = vunpack.c.h.b16 %v1099
    %v1338 = vunpack.c.l.b16 %v1100
    %v1339 = vunpack.c.l.b16 %v1101
    %v1340 = vunpack.c.h.b16 %v1101
    %v1341 = vunpack.c.l.b16 %v1102
    %v1342 = vunpack.c.l.b16 %v1103
    %v1343 = vunpack.c.h.b16 %v1103
    %v1344 = vunpack.c.l.b16 %v1104
    %v1345 = vunpack.c.l.b16 %v1105
    %v1346 = vunpack.c.h.b16 %v1105
    %v1347 = vunpack.c.l.b16 %v1106
    %v1348 = vunpack.c.l.b16 %v1107
    %v1349 = vunpack.c.h.b16 %v1107
    %v1350 = vunpack.c.l.b16 %v1108
    %v1351 = vunpack.c.l.b16 %v1109
    %v1352 = vunpack.c.h.b16 %v1109
    %v1353 = vunpack.c.l.b16 %v1110
    %v1354 = vunpack.c.l.b16 %v1111
    %v1355 = vunpack.c.h.b16 %v1111
    %v1356 = vunpack.c.l.b16 %v1112
    %v1357 = vunpack.c.l.b16 %v1113
    %v1358 = vunpack.c.h.b16 %v1113
    %v1359 = vunpack.c.l.b16 %v1114
    %v1360 = vunpack.c.l.b16 %v1115
    %v1361 = vunpack.c.h.b16 %v1115
    %v1362 = vunpack.c.l.b16 %v1116
    %v1363 = vunpack.c.l.b16 %v1117
    %v1364 = vunpack.c.h.b16 %v1117
    %v1365 = vunpack.c.l.b16 %v1118
    %v1366 = vunpack.c.l.b16 %v1119
    %v1367 = vunpack.c.h.b16 %v1119
    %v1368 = vunpack.c.l.b16 %v1120
    %v1369 = vpack.c.b16 %v1228, %v1225
    %v1370 = vpack.c.b16 %v1229, %v1226
    %v1371 = vpack.c.b16 %v1230, %v1227
    %v1372 = vpack.c.b16 %v1234, %v1231
    %v1373 = vpack.c.b16 %v1235, %v1232
    %v1374 = vpack.c.b16 %v1236, %v1233
    %v1375 = vpack.c.b16 %v1240, %v1237
    %v1376 = vpack.c.b16 %v1241, %v1238
    %v1377 = vpack.c.b16 %v1242, %v1239
    %v1378 = vpack.c.b16 %v1246, %v1243
    %v1379 = vpack.c.b16 %v1247, %v1244
    %v1380 = vpack.c.b16 %v1248, %v1245
    %v1381 = vpack.c.b16 %v1252, %v1249
    %v1382 = vpack.c.b16 %v1253, %v1250
    %v1383 = vpack.c.b16 %v1254, %v1251
    %v1384 = vpack.c.b16 %v1258, %v1255
    %v1385 = vpack.c.b16 %v1259, %v1256
    %v1386 = vpack.c.b16 %v1260, %v1257
    %v1387 = vpack.c.b16 %v1264, %v1261
    %v1388 = vpack.c.b16 %v1265, %v1262
    %v1389 = vpack.c.b16 %v1266, %v1263
    %v1390 = vpack.c.b16 %v1270, %v1267
    %v1391 = vpack.c.b16 %v1271, %v1268
    %v1392 = vpack.c.b16 %v1272, %v1269
    %v1393 = vpack.c.b16 %v1276, %v1273
    %v1394 = vpack.c.b16 %v1277, %v1274
    %v1395 = vpack.c.b16 %v1278, %v1275
    %v1396 = vpack.c.b16 %v1282, %v1279
    %v1397 = vpack.c.b16 %v1283, %v1280
    %v1398 = vpack.c.b16 %v1284, %v1281
    %v1399 = vpack.c.b16 %v1288, %v1285
    %v1400 = vpack.c.b16 %v1289, %v1286
    %v1401 = vpack.c.b16 %v1290, %v1287
    %v1402 = vpack.c.b16 %v1294, %v1291
    %v1403 = vpack.c.b16 %v1295, %v1292
    %v1404 = vpack.c.b16 %v1296, %v1293
    %v1405 = vpack.c.b16 %v1300, %v1297
    %v1406 = vpack.c.b16 %v1301, %v1298
    %v1407 = vpack.c.b16 %v1302, %v1299
    %v1408 = vpack.c.b16 %v1306, %v1303
    %v1409 = vpack.c.b16 %v1307, %v1304
    %v1410 = vpack.c.b16 %v1308, %v1305
    %v1411 = vpack.c.b16 %v1312, %v1309
    %v1412 = vpack.c.b16 %v1313, %v1310
    %v1413 = vpack.c.b16 %v1314, %v1311
    %v1414 = vpack.c.b16 %v1318, %v1315
    %v1415 = vpack.c.b16 %v1319, %v1316
    %v1416 = vpack.c.b16 %v1320, %v1317
    %v1417 = vpack.c.b16 %v1324, %v1321
    %v1418 = vpack.c.b16 %v1325, %v1322
    %v1419 = vpack.c.b16 %v1326, %v1323
    %v1420 = vpack.c.b16 %v1330, %v1327
    %v1421 = vpack.c.b16 %v1331, %v1328
    %v1422 = vpack.c.b16 %v1332, %v1329
    %v1423 = vpack.c.b16 %v1336, %v1333
    %v1424 = vpack.c.b16 %v1337, %v1334
    %v1425 = vpack.c.b16 %v1338, %v1335
    %v1426 = vpack.c.b16 %v1342, %v1339
    %v1427 = vpack.c.b16 %v1343, %v1340
    %v1428 = vpack.c.b16 %v1344, %v1341
    %v1429 = vpack.c.b16 %v1348, %v1345
    %v1430 = vpack.c.b16 %v1349, %v1346
    %v1431 = vpack.c.b16 %v1350, %v1347
    %v1432 = vpack.c.b16 %v1354, %v1351
    %v1433 = vpack.c.b16 %v1355, %v1352
    %v1434 = vpack.c.b16 %v1356, %v1353
    %v1435 = vpack.c.b16 %v1360, %v1357
    %v1436 = vpack.c.b16 %v1361, %v1358
    %v1437 = vpack.c.b16 %v1362, %v1359
    %v1438 = vpack.c.b16 %v1366, %v1363
    %v1439 = vpack.c.b16 %v1367, %v1364
    %v1440 = vpack.c.b16 %v1368, %v1365
    %1513 = vmatpush.bf16.msra.mxu0 %v1390
    %1514 = vmatpush.bf16.msra.mxu0 %v1387
    %1515 = vmatpush.bf16.msra.mxu0 %v1384
    %1516 = vmatpush.bf16.msra.mxu0 %v1381
    %1517 = vmatpush.bf16.msra.mxu0 %v1378
    %1518 = vmatpush.bf16.msra.mxu0 %v1375
    %1519 = vmatpush.bf16.msra.mxu0 %v1372
    %1520 = vmatpush.bf16.msra.mxu0 %v1369
    %1521 = vmatmul.bf16.gmra.mxu0 %v1022
    %v1522 = vpop.f32.mrf.mxu0
    %v1523 = vadd.f32 %v1123, %v1522
    %v1524 = vpop.f32.mrf.mxu0
    %1525 = vdwg.mxu0
    %1526 = vmatpush.bf16.msra.mxu0 %v1414
    %1527 = vmatpush.bf16.msra.mxu0 %v1411
    %1528 = vmatpush.bf16.msra.mxu0 %v1408
    %1529 = vmatpush.bf16.msra.mxu0 %v1405
    %1530 = vmatpush.bf16.msra.mxu0 %v1402
    %1531 = vmatpush.bf16.msra.mxu0 %v1399
    %1532 = vmatpush.bf16.msra.mxu0 %v1396
    %1533 = vmatpush.bf16.msra.mxu0 %v1393
    %1534 = vmatmul.bf16.gmra.mxu0 %v1023
    %v1535 = vpop.f32.mrf.mxu0
    %v1536 = vadd.f32 %v1523, %v1535
    %v1537 = vpop.f32.mrf.mxu0
    %1538 = vdwg.mxu0
    %1539 = vmatpush.bf16.msra.mxu0 %v1438
    %1540 = vmatpush.bf16.msra.mxu0 %v1435
    %1541 = vmatpush.bf16.msra.mxu0 %v1432
    %1542 = vmatpush.bf16.msra.mxu0 %v1429
    %1543 = vmatpush.bf16.msra.mxu0 %v1426
    %1544 = vmatpush.bf16.msra.mxu0 %v1423
    %1545 = vmatpush.bf16.msra.mxu0 %v1420
    %1546 = vmatpush.bf16.msra.mxu0 %v1417
    %1547 = vmatmul.bf16.gmra.mxu0 %v1024
    %v1548 = vpop.f32.mrf.mxu0
    %v1549 = vadd.f32 %v1536, %v1548
    %v1550 = vpop.f32.mrf.mxu0
    %1551 = vdwg.mxu0
    %1552 = vmatpush.bf16.msra.mxu0 %v1391
    %1553 = vmatpush.bf16.msra.mxu0 %v1388
    %1554 = vmatpush.bf16.msra.mxu0 %v1385
    %1555 = vmatpush.bf16.msra.mxu0 %v1382
    %1556 = vmatpush.bf16.msra.mxu0 %v1379
    %1557 = vmatpush.bf16.msra.mxu0 %v1376
    %1558 = vmatpush.bf16.msra.mxu0 %v1373
    %1559 = vmatpush.bf16.msra.mxu0 %v1370
    %1560 = vmatmul.bf16.gmra.mxu0 %v1022
    %v1561 = vpop.f32.mrf.mxu0
    %v1562 = vadd.f32 %v1124, %v1561
    %v1563 = vpop.f32.mrf.mxu0
    %1564 = vdwg.mxu0
    %1565 = vmatpush.bf16.msra.mxu0 %v1415
    %1566 = vmatpush.bf16.msra.mxu0 %v1412
    %1567 = vmatpush.bf16.msra.mxu0 %v1409
    %1568 = vmatpush.bf16.msra.mxu0 %v1406
    %1569 = vmatpush.bf16.msra.mxu0 %v1403
    %1570 = vmatpush.bf16.msra.mxu0 %v1400
    %1571 = vmatpush.bf16.msra.mxu0 %v1397
    %1572 = vmatpush.bf16.msra.mxu0 %v1394
    %1573 = vmatmul.bf16.gmra.mxu0 %v1023
    %v1574 = vpop.f32.mrf.mxu0
    %v1575 = vadd.f32 %v1562, %v1574
    %v1576 = vpop.f32.mrf.mxu0
    %1577 = vdwg.mxu0
    %1578 = vmatpush.bf16.msra.mxu0 %v1439
    %1579 = vmatpush.bf16.msra.mxu0 %v1436
    %1580 = vmatpush.bf16.msra.mxu0 %v1433
    %1581 = vmatpush.bf16.msra.mxu0 %v1430
    %1582 = vmatpush.bf16.msra.mxu0 %v1427
    %1583 = vmatpush.bf16.msra.mxu0 %v1424
    %1584 = vmatpush.bf16.msra.mxu0 %v1421
    %1585 = vmatpush.bf16.msra.mxu0 %v1418
    %1586 = vmatmul.bf16.gmra.mxu0 %v1024
    %v1587 = vpop.f32.mrf.mxu0
    %v1588 = vadd.f32 %v1575, %v1587
    %v1589 = vpop.f32.mrf.mxu0
    %1590 = vdwg.mxu0
    %1591 = vmatpush.bf16.msra.mxu0 %v1392
    %1592 = vmatpush.bf16.msra.mxu0 %v1389
    %1593 = vmatpush.bf16.msra.mxu0 %v1386
    %1594 = vmatpush.bf16.msra.mxu0 %v1383
    %1595 = vmatpush.bf16.msra.mxu0 %v1380
    %1596 = vmatpush.bf16.msra.mxu0 %v1377
    %1597 = vmatpush.bf16.msra.mxu0 %v1374
    %1598 = vmatpush.bf16.msra.mxu0 %v1371
    %1599 = vmatmul.bf16.gmra.mxu0 %v1022
    %v1600 = vpop.f32.mrf.mxu0
    %v1601 = vadd.f32 %v1125, %v1600
    %v1602 = vpop.f32.mrf.mxu0
    %1603 = vdwg.mxu0
    %1604 = vmatpush.bf16.msra.mxu0 %v1416
    %1605 = vmatpush.bf16.msra.mxu0 %v1413
    %1606 = vmatpush.bf16.msra.mxu0 %v1410
    %1607 = vmatpush.bf16.msra.mxu0 %v1407
    %1608 = vmatpush.bf16.msra.mxu0 %v1404
    %1609 = vmatpush.bf16.msra.mxu0 %v1401
    %1610 = vmatpush.bf16.msra.mxu0 %v1398
    %1611 = vmatpush.bf16.msra.mxu0 %v1395
    %1612 = vmatmul.bf16.gmra.mxu0 %v1023
    %v1613 = vpop.f32.mrf.mxu0
    %v1614 = vadd.f32 %v1601, %v1613
    %v1615 = vpop.f32.mrf.mxu0
    %1616 = vdwg.mxu0
    %1617 = vmatpush.bf16.msra.mxu0 %v1440
    %1618 = vmatpush.bf16.msra.mxu0 %v1437
    %1619 = vmatpush.bf16.msra.mxu0 %v1434
    %1620 = vmatpush.bf16.msra.mxu0 %v1431
    %1621 = vmatpush.bf16.msra.mxu0 %v1428
    %1622 = vmatpush.bf16.msra.mxu0 %v1425
    %1623 = vmatpush.bf16.msra.mxu0 %v1422
    %1624 = vmatpush.bf16.msra.mxu0 %v1419
    %1625 = vmatmul.bf16.gmra.mxu0 %v1024
    %v1626 = vpop.f32.mrf.mxu0
    %v1627 = vadd.f32 %v1614, %v1626
    %v1628 = vpop.f32.mrf.mxu0
    %1629 = vdwg.mxu0
    %v1630 = vmax.f32 %v1549, 0.0
    %v1631 = vmax.f32 %v1588, 0.0
    %v1632 = vmax.f32 %v1627, 0.0
    %v1633 = vpack.c.bf16 %v1630, %v1630
    %v1634 = vpack.c.bf16 %v1631, %v1631
    %v1635 = vpack.c.bf16 %v1632, %v1632
    %v1636 = vld [vmem:[#allocation7] sm:$0xff]
    %v1637 = vld [vmem:[#allocation7 + $0x8] sm:$0xf]
    %v1638 = vld [vmem:[#allocation7 + $0xc] sm:$0xff]
    %v1639 = vld [vmem:[#allocation7 + $0x14] sm:$0xf]
    %v1640 = vld [vmem:[#allocation7 + $0x18] sm:$0xff]
    %v1641 = vld [vmem:[#allocation7 + $0x20] sm:$0xf]
    %v1642 = vld [vmem:[#allocation7 + $0x24] sm:$0xff]
    %v1643 = vld [vmem:[#allocation7 + $0x2c] sm:$0xf]
    %v1644 = vld [vmem:[#allocation7 + $0x30] sm:$0xff]
    %v1645 = vld [vmem:[#allocation7 + $0x38] sm:$0xf]
    %v1646 = vld [vmem:[#allocation7 + $0x3c] sm:$0xff]
    %v1647 = vld [vmem:[#allocation7 + $0x44] sm:$0xf]
    %v1648 = vld [vmem:[#allocation7 + $0x48] sm:$0xff]
    %v1649 = vld [vmem:[#allocation7 + $0x50] sm:$0xf]
    %v1650 = vld [vmem:[#allocation7 + $0x54] sm:$0xff]
    %v1651 = vld [vmem:[#allocation7 + $0x5c] sm:$0xf]
    %v1652 = vld [vmem:[#allocation7 + $0x60] sm:$0xff]
    %v1653 = vld [vmem:[#allocation7 + $0x68] sm:$0xf]
    %v1654 = vld [vmem:[#allocation7 + $0x6c] sm:$0xff]
    %v1655 = vld [vmem:[#allocation7 + $0x74] sm:$0xf]
    %v1656 = vld [vmem:[#allocation7 + $0x78] sm:$0xff]
    %v1657 = vld [vmem:[#allocation7 + $0x80] sm:$0xf]
    %v1658 = vld [vmem:[#allocation7 + $0x84] sm:$0xff]
    %v1659 = vld [vmem:[#allocation7 + $0x8c] sm:$0xf]
    %v1660 = vld [vmem:[#allocation7 + $0x90] sm:$0xff]
    %v1661 = vld [vmem:[#allocation7 + $0x98] sm:$0xf]
    %v1662 = vld [vmem:[#allocation7 + $0x9c] sm:$0xff]
    %v1663 = vld [vmem:[#allocation7 + $0xa4] sm:$0xf]
    %v1664 = vld [vmem:[#allocation7 + $0xa8] sm:$0xff]
    %v1665 = vld [vmem:[#allocation7 + $0xb0] sm:$0xf]
    %v1666 = vld [vmem:[#allocation7 + $0xb4] sm:$0xff]
    %v1667 = vld [vmem:[#allocation7 + $0xbc] sm:$0xf]
    %v1668 = vld [vmem:[#allocation7 + $0xc0] sm:$0xff]
    %v1669 = vld [vmem:[#allocation7 + $0xc8] sm:$0xf]
    %v1670 = vld [vmem:[#allocation7 + $0xcc] sm:$0xff]
    %v1671 = vld [vmem:[#allocation7 + $0xd4] sm:$0xf]
    %v1672 = vld [vmem:[#allocation7 + $0xd8] sm:$0xff]
    %v1673 = vld [vmem:[#allocation7 + $0xe0] sm:$0xf]
    %v1674 = vld [vmem:[#allocation7 + $0xe4] sm:$0xff]
    %v1675 = vld [vmem:[#allocation7 + $0xec] sm:$0xf]
    %v1676 = vld [vmem:[#allocation7 + $0xf0] sm:$0xff]
    %v1677 = vld [vmem:[#allocation7 + $0xf8] sm:$0xf]
    %v1678 = vld [vmem:[#allocation7 + $0xfc] sm:$0xff]
    %v1679 = vld [vmem:[#allocation7 + $0x104] sm:$0xf]
    %v1680 = vld [vmem:[#allocation7 + $0x108] sm:$0xff]
    %v1681 = vld [vmem:[#allocation7 + $0x110] sm:$0xf]
    %v1682 = vld [vmem:[#allocation7 + $0x114] sm:$0xff]
    %v1683 = vld [vmem:[#allocation7 + $0x11c] sm:$0xf]
    %v1684 = vld [vmem:[#allocation7 + $0x120] sm:$0xff]
    %v1685 = vld [vmem:[#allocation7 + $0x128] sm:$0xf]
    %v1686 = vld [vmem:[#allocation7 + $0x12c] sm:$0xff]
    %v1687 = vld [vmem:[#allocation7 + $0x134] sm:$0xf]
    %v1688 = vld [vmem:[#allocation7 + $0x138] sm:$0xff]
    %v1689 = vld [vmem:[#allocation7 + $0x140] sm:$0xf]
    %v1690 = vld [vmem:[#allocation7 + $0x144] sm:$0xff]
    %v1691 = vld [vmem:[#allocation7 + $0x14c] sm:$0xf]
    %v1692 = vld [vmem:[#allocation7 + $0x150] sm:$0xff]
    %v1693 = vld [vmem:[#allocation7 + $0x158] sm:$0xf]
    %v1694 = vld [vmem:[#allocation7 + $0x15c] sm:$0xff]
    %v1695 = vld [vmem:[#allocation7 + $0x164] sm:$0xf]
    %v1696 = vld [vmem:[#allocation7 + $0x168] sm:$0xff]
    %v1697 = vld [vmem:[#allocation7 + $0x170] sm:$0xf]
    %v1698 = vld [vmem:[#allocation7 + $0x174] sm:$0xff]
    %v1699 = vld [vmem:[#allocation7 + $0x17c] sm:$0xf]
    %v1700 = vld [vmem:[#allocation7 + $0x180] sm:$0xff]
    %v1701 = vld [vmem:[#allocation7 + $0x188] sm:$0xf]
    %v1702 = vld [vmem:[#allocation7 + $0x18c] sm:$0xff]
    %v1703 = vld [vmem:[#allocation7 + $0x194] sm:$0xf]
    %v1704 = vld [vmem:[#allocation7 + $0x198] sm:$0xff]
    %v1705 = vld [vmem:[#allocation7 + $0x1a0] sm:$0xf]
    %v1706 = vld [vmem:[#allocation7 + $0x1a4] sm:$0xff]
    %v1707 = vld [vmem:[#allocation7 + $0x1ac] sm:$0xf]
    %v1708 = vld [vmem:[#allocation7 + $0x1b0] sm:$0xff]
    %v1709 = vld [vmem:[#allocation7 + $0x1b8] sm:$0xf]
    %v1710 = vld [vmem:[#allocation7 + $0x1bc] sm:$0xff]
    %v1711 = vld [vmem:[#allocation7 + $0x1c4] sm:$0xf]
    %v1712 = vld [vmem:[#allocation7 + $0x1c8] sm:$0xff]
    %v1713 = vld [vmem:[#allocation7 + $0x1d0] sm:$0xf]
    %v1714 = vld [vmem:[#allocation7 + $0x1d4] sm:$0xff]
    %v1715 = vld [vmem:[#allocation7 + $0x1dc] sm:$0xf]
    %v1716 = vld [vmem:[#allocation7 + $0x1e0] sm:$0xff]
    %v1717 = vld [vmem:[#allocation7 + $0x1e8] sm:$0xf]
    %v1718 = vld [vmem:[#allocation7 + $0x1ec] sm:$0xff]
    %v1719 = vld [vmem:[#allocation7 + $0x1f4] sm:$0xf]
    %v1720 = vld [vmem:[#allocation7 + $0x1f8] sm:$0xff]
    %v1721 = vld [vmem:[#allocation7 + $0x200] sm:$0xf]
    %v1722 = vld [vmem:[#allocation7 + $0x204] sm:$0xff]
    %v1723 = vld [vmem:[#allocation7 + $0x20c] sm:$0xf]
    %v1724 = vld [vmem:[#allocation7 + $0x210] sm:$0xff]
    %v1725 = vld [vmem:[#allocation7 + $0x218] sm:$0xf]
    %v1726 = vld [vmem:[#allocation7 + $0x21c] sm:$0xff]
    %v1727 = vld [vmem:[#allocation7 + $0x224] sm:$0xf]
    %v1728 = vld [vmem:[#allocation7 + $0x228] sm:$0xff]
    %v1729 = vld [vmem:[#allocation7 + $0x230] sm:$0xf]
    %v1730 = vld [vmem:[#allocation7 + $0x234] sm:$0xff]
    %v1731 = vld [vmem:[#allocation7 + $0x23c] sm:$0xf]
    %v1732 = vld [vmem:[%s9] sm:$0x7]
    %v1734 = vperm.slane %v1732, 0
    %v1735 = vperm.slane %v1732, 1
    %v1736 = vperm.slane %v1732, 2
    %v1836 = vunpack.c.l.b16 %v1636
    %v1837 = vunpack.c.h.b16 %v1636
    %v1838 = vunpack.c.l.b16 %v1637
    %v1839 = vunpack.c.l.b16 %v1638
    %v1840 = vunpack.c.h.b16 %v1638
    %v1841 = vunpack.c.l.b16 %v1639
    %v1842 = vunpack.c.l.b16 %v1640
    %v1843 = vunpack.c.h.b16 %v1640
    %v1844 = vunpack.c.l.b16 %v1641
    %v1845 = vunpack.c.l.b16 %v1642
    %v1846 = vunpack.c.h.b16 %v1642
    %v1847 = vunpack.c.l.b16 %v1643
    %v1848 = vunpack.c.l.b16 %v1644
    %v1849 = vunpack.c.h.b16 %v1644
    %v1850 = vunpack.c.l.b16 %v1645
    %v1851 = vunpack.c.l.b16 %v1646
    %v1852 = vunpack.c.h.b16 %v1646
    %v1853 = vunpack.c.l.b16 %v1647
    %v1854 = vunpack.c.l.b16 %v1648
    %v1855 = vunpack.c.h.b16 %v1648
    %v1856 = vunpack.c.l.b16 %v1649
    %v1857 = vunpack.c.l.b16 %v1650
    %v1858 = vunpack.c.h.b16 %v1650
    %v1859 = vunpack.c.l.b16 %v1651
    %v1860 = vunpack.c.l.b16 %v1652
    %v1861 = vunpack.c.h.b16 %v1652
    %v1862 = vunpack.c.l.b16 %v1653
    %v1863 = vunpack.c.l.b16 %v1654
    %v1864 = vunpack.c.h.b16 %v1654
    %v1865 = vunpack.c.l.b16 %v1655
    %v1866 = vunpack.c.l.b16 %v1656
    %v1867 = vunpack.c.h.b16 %v1656
    %v1868 = vunpack.c.l.b16 %v1657
    %v1869 = vunpack.c.l.b16 %v1658
    %v1870 = vunpack.c.h.b16 %v1658
    %v1871 = vunpack.c.l.b16 %v1659
    %v1872 = vunpack.c.l.b16 %v1660
    %v1873 = vunpack.c.h.b16 %v1660
    %v1874 = vunpack.c.l.b16 %v1661
    %v1875 = vunpack.c.l.b16 %v1662
    %v1876 = vunpack.c.h.b16 %v1662
    %v1877 = vunpack.c.l.b16 %v1663
    %v1878 = vunpack.c.l.b16 %v1664
    %v1879 = vunpack.c.h.b16 %v1664
    %v1880 = vunpack.c.l.b16 %v1665
    %v1881 = vunpack.c.l.b16 %v1666
    %v1882 = vunpack.c.h.b16 %v1666
    %v1883 = vunpack.c.l.b16 %v1667
    %v1884 = vunpack.c.l.b16 %v1668
    %v1885 = vunpack.c.h.b16 %v1668
    %v1886 = vunpack.c.l.b16 %v1669
    %v1887 = vunpack.c.l.b16 %v1670
    %v1888 = vunpack.c.h.b16 %v1670
    %v1889 = vunpack.c.l.b16 %v1671
    %v1890 = vunpack.c.l.b16 %v1672
    %v1891 = vunpack.c.h.b16 %v1672
    %v1892 = vunpack.c.l.b16 %v1673
    %v1893 = vunpack.c.l.b16 %v1674
    %v1894 = vunpack.c.h.b16 %v1674
    %v1895 = vunpack.c.l.b16 %v1675
    %v1896 = vunpack.c.l.b16 %v1676
    %v1897 = vunpack.c.h.b16 %v1676
    %v1898 = vunpack.c.l.b16 %v1677
    %v1899 = vunpack.c.l.b16 %v1678
    %v1900 = vunpack.c.h.b16 %v1678
    %v1901 = vunpack.c.l.b16 %v1679
    %v1902 = vunpack.c.l.b16 %v1680
    %v1903 = vunpack.c.h.b16 %v1680
    %v1904 = vunpack.c.l.b16 %v1681
    %v1905 = vunpack.c.l.b16 %v1682
    %v1906 = vunpack.c.h.b16 %v1682
    %v1907 = vunpack.c.l.b16 %v1683
    %v1908 = vunpack.c.l.b16 %v1684
    %v1909 = vunpack.c.h.b16 %v1684
    %v1910 = vunpack.c.l.b16 %v1685
    %v1911 = vunpack.c.l.b16 %v1686
    %v1912 = vunpack.c.h.b16 %v1686
    %v1913 = vunpack.c.l.b16 %v1687
    %v1914 = vunpack.c.l.b16 %v1688
    %v1915 = vunpack.c.h.b16 %v1688
    %v1916 = vunpack.c.l.b16 %v1689
    %v1917 = vunpack.c.l.b16 %v1690
    %v1918 = vunpack.c.h.b16 %v1690
    %v1919 = vunpack.c.l.b16 %v1691
    %v1920 = vunpack.c.l.b16 %v1692
    %v1921 = vunpack.c.h.b16 %v1692
    %v1922 = vunpack.c.l.b16 %v1693
    %v1923 = vunpack.c.l.b16 %v1694
    %v1924 = vunpack.c.h.b16 %v1694
    %v1925 = vunpack.c.l.b16 %v1695
    %v1926 = vunpack.c.l.b16 %v1696
    %v1927 = vunpack.c.h.b16 %v1696
    %v1928 = vunpack.c.l.b16 %v1697
    %v1929 = vunpack.c.l.b16 %v1698
    %v1930 = vunpack.c.h.b16 %v1698
    %v1931 = vunpack.c.l.b16 %v1699
    %v1932 = vunpack.c.l.b16 %v1700
    %v1933 = vunpack.c.h.b16 %v1700
    %v1934 = vunpack.c.l.b16 %v1701
    %v1935 = vunpack.c.l.b16 %v1702
    %v1936 = vunpack.c.h.b16 %v1702
    %v1937 = vunpack.c.l.b16 %v1703
    %v1938 = vunpack.c.l.b16 %v1704
    %v1939 = vunpack.c.h.b16 %v1704
    %v1940 = vunpack.c.l.b16 %v1705
    %v1941 = vunpack.c.l.b16 %v1706
    %v1942 = vunpack.c.h.b16 %v1706
    %v1943 = vunpack.c.l.b16 %v1707
    %v1944 = vunpack.c.l.b16 %v1708
    %v1945 = vunpack.c.h.b16 %v1708
    %v1946 = vunpack.c.l.b16 %v1709
    %v1947 = vunpack.c.l.b16 %v1710
    %v1948 = vunpack.c.h.b16 %v1710
    %v1949 = vunpack.c.l.b16 %v1711
    %v1950 = vunpack.c.l.b16 %v1712
    %v1951 = vunpack.c.h.b16 %v1712
    %v1952 = vunpack.c.l.b16 %v1713
    %v1953 = vunpack.c.l.b16 %v1714
    %v1954 = vunpack.c.h.b16 %v1714
    %v1955 = vunpack.c.l.b16 %v1715
    %v1956 = vunpack.c.l.b16 %v1716
    %v1957 = vunpack.c.h.b16 %v1716
    %v1958 = vunpack.c.l.b16 %v1717
    %v1959 = vunpack.c.l.b16 %v1718
    %v1960 = vunpack.c.h.b16 %v1718
    %v1961 = vunpack.c.l.b16 %v1719
    %v1962 = vunpack.c.l.b16 %v1720
    %v1963 = vunpack.c.h.b16 %v1720
    %v1964 = vunpack.c.l.b16 %v1721
    %v1965 = vunpack.c.l.b16 %v1722
    %v1966 = vunpack.c.h.b16 %v1722
    %v1967 = vunpack.c.l.b16 %v1723
    %v1968 = vunpack.c.l.b16 %v1724
    %v1969 = vunpack.c.h.b16 %v1724
    %v1970 = vunpack.c.l.b16 %v1725
    %v1971 = vunpack.c.l.b16 %v1726
    %v1972 = vunpack.c.h.b16 %v1726
    %v1973 = vunpack.c.l.b16 %v1727
    %v1974 = vunpack.c.l.b16 %v1728
    %v1975 = vunpack.c.h.b16 %v1728
    %v1976 = vunpack.c.l.b16 %v1729
    %v1977 = vunpack.c.l.b16 %v1730
    %v1978 = vunpack.c.h.b16 %v1730
    %v1979 = vunpack.c.l.b16 %v1731
    %v1980 = vpack.c.b16 %v1839, %v1836
    %v1981 = vpack.c.b16 %v1840, %v1837
    %v1982 = vpack.c.b16 %v1841, %v1838
    %v1983 = vpack.c.b16 %v1845, %v1842
    %v1984 = vpack.c.b16 %v1846, %v1843
    %v1985 = vpack.c.b16 %v1847, %v1844
    %v1986 = vpack.c.b16 %v1851, %v1848
    %v1987 = vpack.c.b16 %v1852, %v1849
    %v1988 = vpack.c.b16 %v1853, %v1850
    %v1989 = vpack.c.b16 %v1857, %v1854
    %v1990 = vpack.c.b16 %v1858, %v1855
    %v1991 = vpack.c.b16 %v1859, %v1856
    %v1992 = vpack.c.b16 %v1863, %v1860
    %v1993 = vpack.c.b16 %v1864, %v1861
    %v1994 = vpack.c.b16 %v1865, %v1862
    %v1995 = vpack.c.b16 %v1869, %v1866
    %v1996 = vpack.c.b16 %v1870, %v1867
    %v1997 = vpack.c.b16 %v1871, %v1868
    %v1998 = vpack.c.b16 %v1875, %v1872
    %v1999 = vpack.c.b16 %v1876, %v1873
    %v2000 = vpack.c.b16 %v1877, %v1874
    %v2001 = vpack.c.b16 %v1881, %v1878
    %v2002 = vpack.c.b16 %v1882, %v1879
    %v2003 = vpack.c.b16 %v1883, %v1880
    %v2004 = vpack.c.b16 %v1887, %v1884
    %v2005 = vpack.c.b16 %v1888, %v1885
    %v2006 = vpack.c.b16 %v1889, %v1886
    %v2007 = vpack.c.b16 %v1893, %v1890
    %v2008 = vpack.c.b16 %v1894, %v1891
    %v2009 = vpack.c.b16 %v1895, %v1892
    %v2010 = vpack.c.b16 %v1899, %v1896
    %v2011 = vpack.c.b16 %v1900, %v1897
    %v2012 = vpack.c.b16 %v1901, %v1898
    %v2013 = vpack.c.b16 %v1905, %v1902
    %v2014 = vpack.c.b16 %v1906, %v1903
    %v2015 = vpack.c.b16 %v1907, %v1904
    %v2016 = vpack.c.b16 %v1911, %v1908
    %v2017 = vpack.c.b16 %v1912, %v1909
    %v2018 = vpack.c.b16 %v1913, %v1910
    %v2019 = vpack.c.b16 %v1917, %v1914
    %v2020 = vpack.c.b16 %v1918, %v1915
    %v2021 = vpack.c.b16 %v1919, %v1916
    %v2022 = vpack.c.b16 %v1923, %v1920
    %v2023 = vpack.c.b16 %v1924, %v1921
    %v2024 = vpack.c.b16 %v1925, %v1922
    %v2025 = vpack.c.b16 %v1929, %v1926
    %v2026 = vpack.c.b16 %v1930, %v1927
    %v2027 = vpack.c.b16 %v1931, %v1928
    %v2028 = vpack.c.b16 %v1935, %v1932
    %v2029 = vpack.c.b16 %v1936, %v1933
    %v2030 = vpack.c.b16 %v1937, %v1934
    %v2031 = vpack.c.b16 %v1941, %v1938
    %v2032 = vpack.c.b16 %v1942, %v1939
    %v2033 = vpack.c.b16 %v1943, %v1940
    %v2034 = vpack.c.b16 %v1947, %v1944
    %v2035 = vpack.c.b16 %v1948, %v1945
    %v2036 = vpack.c.b16 %v1949, %v1946
    %v2037 = vpack.c.b16 %v1953, %v1950
    %v2038 = vpack.c.b16 %v1954, %v1951
    %v2039 = vpack.c.b16 %v1955, %v1952
    %v2040 = vpack.c.b16 %v1959, %v1956
    %v2041 = vpack.c.b16 %v1960, %v1957
    %v2042 = vpack.c.b16 %v1961, %v1958
    %v2043 = vpack.c.b16 %v1965, %v1962
    %v2044 = vpack.c.b16 %v1966, %v1963
    %v2045 = vpack.c.b16 %v1967, %v1964
    %v2046 = vpack.c.b16 %v1971, %v1968
    %v2047 = vpack.c.b16 %v1972, %v1969
    %v2048 = vpack.c.b16 %v1973, %v1970
    %v2049 = vpack.c.b16 %v1977, %v1974
    %v2050 = vpack.c.b16 %v1978, %v1975
    %v2051 = vpack.c.b16 %v1979, %v1976
    %2124 = vmatpush.bf16.msra.mxu0 %v2001
    %2125 = vmatpush.bf16.msra.mxu0 %v1998
    %2126 = vmatpush.bf16.msra.mxu0 %v1995
    %2127 = vmatpush.bf16.msra.mxu0 %v1992
    %2128 = vmatpush.bf16.msra.mxu0 %v1989
    %2129 = vmatpush.bf16.msra.mxu0 %v1986
    %2130 = vmatpush.bf16.msra.mxu0 %v1983
    %2131 = vmatpush.bf16.msra.mxu0 %v1980
    %2132 = vmatmul.bf16.gmra.mxu0 %v1633
    %v2133 = vpop.f32.mrf.mxu0
    %v2134 = vadd.f32 %v1734, %v2133
    %v2135 = vpop.f32.mrf.mxu0
    %2136 = vdwg.mxu0
    %2137 = vmatpush.bf16.msra.mxu0 %v2025
    %2138 = vmatpush.bf16.msra.mxu0 %v2022
    %2139 = vmatpush.bf16.msra.mxu0 %v2019
    %2140 = vmatpush.bf16.msra.mxu0 %v2016
    %2141 = vmatpush.bf16.msra.mxu0 %v2013
    %2142 = vmatpush.bf16.msra.mxu0 %v2010
    %2143 = vmatpush.bf16.msra.mxu0 %v2007
    %2144 = vmatpush.bf16.msra.mxu0 %v2004
    %2145 = vmatmul.bf16.gmra.mxu0 %v1634
    %v2146 = vpop.f32.mrf.mxu0
    %v2147 = vadd.f32 %v2134, %v2146
    %v2148 = vpop.f32.mrf.mxu0
    %2149 = vdwg.mxu0
    %2150 = vmatpush.bf16.msra.mxu0 %v2049
    %2151 = vmatpush.bf16.msra.mxu0 %v2046
    %2152 = vmatpush.bf16.msra.mxu0 %v2043
    %2153 = vmatpush.bf16.msra.mxu0 %v2040
    %2154 = vmatpush.bf16.msra.mxu0 %v2037
    %2155 = vmatpush.bf16.msra.mxu0 %v2034
    %2156 = vmatpush.bf16.msra.mxu0 %v2031
    %2157 = vmatpush.bf16.msra.mxu0 %v2028
    %2158 = vmatmul.bf16.gmra.mxu0 %v1635
    %v2159 = vpop.f32.mrf.mxu0
    %v2160 = vadd.f32 %v2147, %v2159
    %v2161 = vpop.f32.mrf.mxu0
    %2162 = vdwg.mxu0
    %2163 = vmatpush.bf16.msra.mxu0 %v2002
    %2164 = vmatpush.bf16.msra.mxu0 %v1999
    %2165 = vmatpush.bf16.msra.mxu0 %v1996
    %2166 = vmatpush.bf16.msra.mxu0 %v1993
    %2167 = vmatpush.bf16.msra.mxu0 %v1990
    %2168 = vmatpush.bf16.msra.mxu0 %v1987
    %2169 = vmatpush.bf16.msra.mxu0 %v1984
    %2170 = vmatpush.bf16.msra.mxu0 %v1981
    %2171 = vmatmul.bf16.gmra.mxu0 %v1633
    %v2172 = vpop.f32.mrf.mxu0
    %v2173 = vadd.f32 %v1735, %v2172
    %v2174 = vpop.f32.mrf.mxu0
    %2175 = vdwg.mxu0
    %2176 = vmatpush.bf16.msra.mxu0 %v2026
    %2177 = vmatpush.bf16.msra.mxu0 %v2023
    %2178 = vmatpush.bf16.msra.mxu0 %v2020
    %2179 = vmatpush.bf16.msra.mxu0 %v2017
    %2180 = vmatpush.bf16.msra.mxu0 %v2014
    %2181 = vmatpush.bf16.msra.mxu0 %v2011
    %2182 = vmatpush.bf16.msra.mxu0 %v2008
    %2183 = vmatpush.bf16.msra.mxu0 %v2005
    %2184 = vmatmul.bf16.gmra.mxu0 %v1634
    %v2185 = vpop.f32.mrf.mxu0
    %v2186 = vadd.f32 %v2173, %v2185
    %v2187 = vpop.f32.mrf.mxu0
    %2188 = vdwg.mxu0
    %2189 = vmatpush.bf16.msra.mxu0 %v2050
    %2190 = vmatpush.bf16.msra.mxu0 %v2047
    %2191 = vmatpush.bf16.msra.mxu0 %v2044
    %2192 = vmatpush.bf16.msra.mxu0 %v2041
    %2193 = vmatpush.bf16.msra.mxu0 %v2038
    %2194 = vmatpush.bf16.msra.mxu0 %v2035
    %2195 = vmatpush.bf16.msra.mxu0 %v2032
    %2196 = vmatpush.bf16.msra.mxu0 %v2029
    %2197 = vmatmul.bf16.gmra.mxu0 %v1635
    %v2198 = vpop.f32.mrf.mxu0
    %v2199 = vadd.f32 %v2186, %v2198
    %v2200 = vpop.f32.mrf.mxu0
    %2201 = vdwg.mxu0
    %2202 = vmatpush.bf16.msra.mxu0 %v2003
    %2203 = vmatpush.bf16.msra.mxu0 %v2000
    %2204 = vmatpush.bf16.msra.mxu0 %v1997
    %2205 = vmatpush.bf16.msra.mxu0 %v1994
    %2206 = vmatpush.bf16.msra.mxu0 %v1991
    %2207 = vmatpush.bf16.msra.mxu0 %v1988
    %2208 = vmatpush.bf16.msra.mxu0 %v1985
    %2209 = vmatpush.bf16.msra.mxu0 %v1982
    %2210 = vmatmul.bf16.gmra.mxu0 %v1633
    %v2211 = vpop.f32.mrf.mxu0
    %v2212 = vadd.f32 %v1736, %v2211
    %v2213 = vpop.f32.mrf.mxu0
    %2214 = vdwg.mxu0
    %2215 = vmatpush.bf16.msra.mxu0 %v2027
    %2216 = vmatpush.bf16.msra.mxu0 %v2024
    %2217 = vmatpush.bf16.msra.mxu0 %v2021
    %2218 = vmatpush.bf16.msra.mxu0 %v2018
    %2219 = vmatpush.bf16.msra.mxu0 %v2015
    %2220 = vmatpush.bf16.msra.mxu0 %v2012
    %2221 = vmatpush.bf16.msra.mxu0 %v2009
    %2222 = vmatpush.bf16.msra.mxu0 %v2006
    %2223 = vmatmul.bf16.gmra.mxu0 %v1634
    %v2224 = vpop.f32.mrf.mxu0
    %v2225 = vadd.f32 %v2212, %v2224
    %v2226 = vpop.f32.mrf.mxu0
    %2227 = vdwg.mxu0
    %2228 = vmatpush.bf16.msra.mxu0 %v2051
    %2229 = vmatpush.bf16.msra.mxu0 %v2048
    %2230 = vmatpush.bf16.msra.mxu0 %v2045
    %2231 = vmatpush.bf16.msra.mxu0 %v2042
    %2232 = vmatpush.bf16.msra.mxu0 %v2039
    %2233 = vmatpush.bf16.msra.mxu0 %v2036
    %2234 = vmatpush.bf16.msra.mxu0 %v2033
    %2235 = vmatpush.bf16.msra.mxu0 %v2030
    %2236 = vmatmul.bf16.gmra.mxu0 %v1635
    %v2237 = vpop.f32.mrf.mxu0
    %v2238 = vadd.f32 %v2225, %v2237
    %v2239 = vpop.f32.mrf.mxu0
    %2240 = vdwg.mxu0
    %v2241 = vmax.f32 %v2160, 0.0
    %v2242 = vmax.f32 %v2199, 0.0
    %v2243 = vmax.f32 %v2238, 0.0
    %v2244 = vpack.c.bf16 %v2241, %v2241
    %v2245 = vpack.c.bf16 %v2242, %v2242
    %v2246 = vpack.c.bf16 %v2243, %v2243
    %v2247 = vld [vmem:[%s10] sm:$0xff]
    %v2248 = vld [vmem:[%s10 + $0x8] sm:$0xff]
    %v2249 = vld [vmem:[%s10 + $0x10] sm:$0xff]
    %v2250 = vld [vmem:[%s10 + $0x18] sm:$0xff]
    %v2251 = vld [vmem:[%s10 + $0x20] sm:$0xff]
    %v2252 = vld [vmem:[%s10 + $0x28] sm:$0xff]
    %v2253 = vld [vmem:[%s10 + $0x30] sm:$0xff]
    %v2254 = vld [vmem:[%s10 + $0x38] sm:$0xff]
    %v2255 = vld [vmem:[%s10 + $0x40] sm:$0xff]
    %v2256 = vld [vmem:[%s10 + $0x48] sm:$0xff]
    %v2257 = vld [vmem:[%s10 + $0x50] sm:$0xff]
    %v2258 = vld [vmem:[%s10 + $0x58] sm:$0xff]
    %v2259 = vld [vmem:[%s10 + $0x60] sm:$0xff]
    %v2260 = vld [vmem:[%s10 + $0x68] sm:$0xff]
    %v2261 = vld [vmem:[%s10 + $0x70] sm:$0xff]
    %v2262 = vld [vmem:[%s10 + $0x78] sm:$0xff]
    %v2263 = vld [vmem:[%s10 + $0x80] sm:$0xff]
    %v2264 = vld [vmem:[%s10 + $0x88] sm:$0xff]
    %v2265 = vld [vmem:[%s10 + $0x90] sm:$0xff]
    %v2266 = vld [vmem:[%s10 + $0x98] sm:$0xff]
    %v2267 = vld [vmem:[%s10 + $0xa0] sm:$0xff]
    %v2268 = vld [vmem:[%s10 + $0xa8] sm:$0xff]
    %v2269 = vld [vmem:[%s10 + $0xb0] sm:$0xff]
    %v2270 = vld [vmem:[%s10 + $0xb8] sm:$0xff]
    %v2271 = vld [vmem:[%s10 + $0xc0] sm:$0xff]
    %v2272 = vld [vmem:[%s10 + $0xc8] sm:$0xff]
    %v2273 = vld [vmem:[%s10 + $0xd0] sm:$0xff]
    %v2274 = vld [vmem:[%s10 + $0xd8] sm:$0xff]
    %v2275 = vld [vmem:[%s10 + $0xe0] sm:$0xff]
    %v2276 = vld [vmem:[%s10 + $0xe8] sm:$0xff]
    %v2277 = vld [vmem:[%s10 + $0xf0] sm:$0xff]
    %v2278 = vld [vmem:[%s10 + $0xf8] sm:$0xff]
    %v2279 = vld [vmem:[%s10 + $0x100] sm:$0xff]
    %v2280 = vld [vmem:[%s10 + $0x108] sm:$0xff]
    %v2281 = vld [vmem:[%s10 + $0x110] sm:$0xff]
    %v2282 = vld [vmem:[%s10 + $0x118] sm:$0xff]
    %v2283 = vld [vmem:[%s10 + $0x120] sm:$0xff]
    %v2284 = vld [vmem:[%s10 + $0x128] sm:$0xff]
    %v2285 = vld [vmem:[%s10 + $0x130] sm:$0xff]
    %v2286 = vld [vmem:[%s10 + $0x138] sm:$0xff]
    %v2287 = vld [vmem:[%s10 + $0x140] sm:$0xff]
    %v2288 = vld [vmem:[%s10 + $0x148] sm:$0xff]
    %v2289 = vld [vmem:[%s10 + $0x150] sm:$0xff]
    %v2290 = vld [vmem:[%s10 + $0x158] sm:$0xff]
    %v2291 = vld [vmem:[%s10 + $0x160] sm:$0xff]
    %v2292 = vld [vmem:[%s10 + $0x168] sm:$0xff]
    %v2293 = vld [vmem:[%s10 + $0x170] sm:$0xff]
    %v2294 = vld [vmem:[%s10 + $0x178] sm:$0xff]
    %v2295 = vld [vmem:[%s11] sm:$0x3]
    %v2297 = vperm.slane %v2295, 0
    %v2298 = vperm.slane %v2295, 1
    %v2349 = vunpack.c.l.b16 %v2247
    %v2350 = vunpack.c.h.b16 %v2247
    %v2351 = vunpack.c.l.b16 %v2248
    %v2352 = vunpack.c.h.b16 %v2248
    %v2353 = vunpack.c.l.b16 %v2249
    %v2354 = vunpack.c.h.b16 %v2249
    %v2355 = vunpack.c.l.b16 %v2250
    %v2356 = vunpack.c.h.b16 %v2250
    %v2357 = vunpack.c.l.b16 %v2251
    %v2358 = vunpack.c.h.b16 %v2251
    %v2359 = vunpack.c.l.b16 %v2252
    %v2360 = vunpack.c.h.b16 %v2252
    %v2361 = vunpack.c.l.b16 %v2253
    %v2362 = vunpack.c.h.b16 %v2253
    %v2363 = vunpack.c.l.b16 %v2254
    %v2364 = vunpack.c.h.b16 %v2254
    %v2365 = vunpack.c.l.b16 %v2255
    %v2366 = vunpack.c.h.b16 %v2255
    %v2367 = vunpack.c.l.b16 %v2256
    %v2368 = vunpack.c.h.b16 %v2256
    %v2369 = vunpack.c.l.b16 %v2257
    %v2370 = vunpack.c.h.b16 %v2257
    %v2371 = vunpack.c.l.b16 %v2258
    %v2372 = vunpack.c.h.b16 %v2258
    %v2373 = vunpack.c.l.b16 %v2259
    %v2374 = vunpack.c.h.b16 %v2259
    %v2375 = vunpack.c.l.b16 %v2260
    %v2376 = vunpack.c.h.b16 %v2260
    %v2377 = vunpack.c.l.b16 %v2261
    %v2378 = vunpack.c.h.b16 %v2261
    %v2379 = vunpack.c.l.b16 %v2262
    %v2380 = vunpack.c.h.b16 %v2262
    %v2381 = vunpack.c.l.b16 %v2263
    %v2382 = vunpack.c.h.b16 %v2263
    %v2383 = vunpack.c.l.b16 %v2264
    %v2384 = vunpack.c.h.b16 %v2264
    %v2385 = vunpack.c.l.b16 %v2265
    %v2386 = vunpack.c.h.b16 %v2265
    %v2387 = vunpack.c.l.b16 %v2266
    %v2388 = vunpack.c.h.b16 %v2266
    %v2389 = vunpack.c.l.b16 %v2267
    %v2390 = vunpack.c.h.b16 %v2267
    %v2391 = vunpack.c.l.b16 %v2268
    %v2392 = vunpack.c.h.b16 %v2268
    %v2393 = vunpack.c.l.b16 %v2269
    %v2394 = vunpack.c.h.b16 %v2269
    %v2395 = vunpack.c.l.b16 %v2270
    %v2396 = vunpack.c.h.b16 %v2270
    %v2397 = vunpack.c.l.b16 %v2271
    %v2398 = vunpack.c.h.b16 %v2271
    %v2399 = vunpack.c.l.b16 %v2272
    %v2400 = vunpack.c.h.b16 %v2272
    %v2401 = vunpack.c.l.b16 %v2273
    %v2402 = vunpack.c.h.b16 %v2273
    %v2403 = vunpack.c.l.b16 %v2274
    %v2404 = vunpack.c.h.b16 %v2274
    %v2405 = vunpack.c.l.b16 %v2275
    %v2406 = vunpack.c.h.b16 %v2275
    %v2407 = vunpack.c.l.b16 %v2276
    %v2408 = vunpack.c.h.b16 %v2276
    %v2409 = vunpack.c.l.b16 %v2277
    %v2410 = vunpack.c.h.b16 %v2277
    %v2411 = vunpack.c.l.b16 %v2278
    %v2412 = vunpack.c.h.b16 %v2278
    %v2413 = vunpack.c.l.b16 %v2279
    %v2414 = vunpack.c.h.b16 %v2279
    %v2415 = vunpack.c.l.b16 %v2280
    %v2416 = vunpack.c.h.b16 %v2280
    %v2417 = vunpack.c.l.b16 %v2281
    %v2418 = vunpack.c.h.b16 %v2281
    %v2419 = vunpack.c.l.b16 %v2282
    %v2420 = vunpack.c.h.b16 %v2282
    %v2421 = vunpack.c.l.b16 %v2283
    %v2422 = vunpack.c.h.b16 %v2283
    %v2423 = vunpack.c.l.b16 %v2284
    %v2424 = vunpack.c.h.b16 %v2284
    %v2425 = vunpack.c.l.b16 %v2285
    %v2426 = vunpack.c.h.b16 %v2285
    %v2427 = vunpack.c.l.b16 %v2286
    %v2428 = vunpack.c.h.b16 %v2286
    %v2429 = vunpack.c.l.b16 %v2287
    %v2430 = vunpack.c.h.b16 %v2287
    %v2431 = vunpack.c.l.b16 %v2288
    %v2432 = vunpack.c.h.b16 %v2288
    %v2433 = vunpack.c.l.b16 %v2289
    %v2434 = vunpack.c.h.b16 %v2289
    %v2435 = vunpack.c.l.b16 %v2290
    %v2436 = vunpack.c.h.b16 %v2290
    %v2437 = vunpack.c.l.b16 %v2291
    %v2438 = vunpack.c.h.b16 %v2291
    %v2439 = vunpack.c.l.b16 %v2292
    %v2440 = vunpack.c.h.b16 %v2292
    %v2441 = vunpack.c.l.b16 %v2293
    %v2442 = vunpack.c.h.b16 %v2293
    %v2443 = vunpack.c.l.b16 %v2294
    %v2444 = vunpack.c.h.b16 %v2294
    %v2445 = vpack.c.b16 %v2351, %v2349
    %v2446 = vpack.c.b16 %v2352, %v2350
    %v2447 = vpack.c.b16 %v2355, %v2353
    %v2448 = vpack.c.b16 %v2356, %v2354
    %v2449 = vpack.c.b16 %v2359, %v2357
    %v2450 = vpack.c.b16 %v2360, %v2358
    %v2451 = vpack.c.b16 %v2363, %v2361
    %v2452 = vpack.c.b16 %v2364, %v2362
    %v2453 = vpack.c.b16 %v2367, %v2365
    %v2454 = vpack.c.b16 %v2368, %v2366
    %v2455 = vpack.c.b16 %v2371, %v2369
    %v2456 = vpack.c.b16 %v2372, %v2370
    %v2457 = vpack.c.b16 %v2375, %v2373
    %v2458 = vpack.c.b16 %v2376, %v2374
    %v2459 = vpack.c.b16 %v2379, %v2377
    %v2460 = vpack.c.b16 %v2380, %v2378
    %v2461 = vpack.c.b16 %v2383, %v2381
    %v2462 = vpack.c.b16 %v2384, %v2382
    %v2463 = vpack.c.b16 %v2387, %v2385
    %v2464 = vpack.c.b16 %v2388, %v2386
    %v2465 = vpack.c.b16 %v2391, %v2389
    %v2466 = vpack.c.b16 %v2392, %v2390
    %v2467 = vpack.c.b16 %v2395, %v2393
    %v2468 = vpack.c.b16 %v2396, %v2394
    %v2469 = vpack.c.b16 %v2399, %v2397
    %v2470 = vpack.c.b16 %v2400, %v2398
    %v2471 = vpack.c.b16 %v2403, %v2401
    %v2472 = vpack.c.b16 %v2404, %v2402
    %v2473 = vpack.c.b16 %v2407, %v2405
    %v2474 = vpack.c.b16 %v2408, %v2406
    %v2475 = vpack.c.b16 %v2411, %v2409
    %v2476 = vpack.c.b16 %v2412, %v2410
    %v2477 = vpack.c.b16 %v2415, %v2413
    %v2478 = vpack.c.b16 %v2416, %v2414
    %v2479 = vpack.c.b16 %v2419, %v2417
    %v2480 = vpack.c.b16 %v2420, %v2418
    %v2481 = vpack.c.b16 %v2423, %v2421
    %v2482 = vpack.c.b16 %v2424, %v2422
    %v2483 = vpack.c.b16 %v2427, %v2425
    %v2484 = vpack.c.b16 %v2428, %v2426
    %v2485 = vpack.c.b16 %v2431, %v2429
    %v2486 = vpack.c.b16 %v2432, %v2430
    %v2487 = vpack.c.b16 %v2435, %v2433
    %v2488 = vpack.c.b16 %v2436, %v2434
    %v2489 = vpack.c.b16 %v2439, %v2437
    %v2490 = vpack.c.b16 %v2440, %v2438
    %v2491 = vpack.c.b16 %v2443, %v2441
    %v2492 = vpack.c.b16 %v2444, %v2442
    %2541 = vmatpush.bf16.msra.mxu0 %v2459
    %2542 = vmatpush.bf16.msra.mxu0 %v2457
    %2543 = vmatpush.bf16.msra.mxu0 %v2455
    %2544 = vmatpush.bf16.msra.mxu0 %v2453
    %2545 = vmatpush.bf16.msra.mxu0 %v2451
    %2546 = vmatpush.bf16.msra.mxu0 %v2449
    %2547 = vmatpush.bf16.msra.mxu0 %v2447
    %2548 = vmatpush.bf16.msra.mxu0 %v2445
    %2549 = vmatmul.bf16.gmra.mxu0 %v2244
    %v2550 = vpop.f32.mrf.mxu0
    %v2551 = vadd.f32 %v2297, %v2550
    %v2552 = vpop.f32.mrf.mxu0
    %2553 = vdwg.mxu0
    %2554 = vmatpush.bf16.msra.mxu0 %v2475
    %2555 = vmatpush.bf16.msra.mxu0 %v2473
    %2556 = vmatpush.bf16.msra.mxu0 %v2471
    %2557 = vmatpush.bf16.msra.mxu0 %v2469
    %2558 = vmatpush.bf16.msra.mxu0 %v2467
    %2559 = vmatpush.bf16.msra.mxu0 %v2465
    %2560 = vmatpush.bf16.msra.mxu0 %v2463
    %2561 = vmatpush.bf16.msra.mxu0 %v2461
    %2562 = vmatmul.bf16.gmra.mxu0 %v2245
    %v2563 = vpop.f32.mrf.mxu0
    %v2564 = vadd.f32 %v2551, %v2563
    %v2565 = vpop.f32.mrf.mxu0
    %2566 = vdwg.mxu0
    %2567 = vmatpush.bf16.msra.mxu0 %v2491
    %2568 = vmatpush.bf16.msra.mxu0 %v2489
    %2569 = vmatpush.bf16.msra.mxu0 %v2487
    %2570 = vmatpush.bf16.msra.mxu0 %v2485
    %2571 = vmatpush.bf16.msra.mxu0 %v2483
    %2572 = vmatpush.bf16.msra.mxu0 %v2481
    %2573 = vmatpush.bf16.msra.mxu0 %v2479
    %2574 = vmatpush.bf16.msra.mxu0 %v2477
    %2575 = vmatmul.bf16.gmra.mxu0 %v2246
    %v2576 = vpop.f32.mrf.mxu0
    %v2577 = vadd.f32 %v2564, %v2576
    %v2578 = vpop.f32.mrf.mxu0
    %2579 = vdwg.mxu0
    %2580 = vmatpush.bf16.msra.mxu0 %v2460
    %2581 = vmatpush.bf16.msra.mxu0 %v2458
    %2582 = vmatpush.bf16.msra.mxu0 %v2456
    %2583 = vmatpush.bf16.msra.mxu0 %v2454
    %2584 = vmatpush.bf16.msra.mxu0 %v2452
    %2585 = vmatpush.bf16.msra.mxu0 %v2450
    %2586 = vmatpush.bf16.msra.mxu0 %v2448
    %2587 = vmatpush.bf16.msra.mxu0 %v2446
    %2588 = vmatmul.bf16.gmra.mxu0 %v2244
    %v2589 = vpop.f32.mrf.mxu0
    %v2590 = vadd.f32 %v2298, %v2589
    %v2591 = vpop.f32.mrf.mxu0
    %2592 = vdwg.mxu0
    %2593 = vmatpush.bf16.msra.mxu0 %v2476
    %2594 = vmatpush.bf16.msra.mxu0 %v2474
    %2595 = vmatpush.bf16.msra.mxu0 %v2472
    %2596 = vmatpush.bf16.msra.mxu0 %v2470
    %2597 = vmatpush.bf16.msra.mxu0 %v2468
    %2598 = vmatpush.bf16.msra.mxu0 %v2466
    %2599 = vmatpush.bf16.msra.mxu0 %v2464
    %2600 = vmatpush.bf16.msra.mxu0 %v2462
    %2601 = vmatmul.bf16.gmra.mxu0 %v2245
    %v2602 = vpop.f32.mrf.mxu0
    %v2603 = vadd.f32 %v2590, %v2602
    %v2604 = vpop.f32.mrf.mxu0
    %2605 = vdwg.mxu0
    %2606 = vmatpush.bf16.msra.mxu0 %v2492
    %2607 = vmatpush.bf16.msra.mxu0 %v2490
    %2608 = vmatpush.bf16.msra.mxu0 %v2488
    %2609 = vmatpush.bf16.msra.mxu0 %v2486
    %2610 = vmatpush.bf16.msra.mxu0 %v2484
    %2611 = vmatpush.bf16.msra.mxu0 %v2482
    %2612 = vmatpush.bf16.msra.mxu0 %v2480
    %2613 = vmatpush.bf16.msra.mxu0 %v2478
    %2614 = vmatmul.bf16.gmra.mxu0 %v2246
    %v2615 = vpop.f32.mrf.mxu0
    %v2616 = vadd.f32 %v2603, %v2615
    %v2617 = vpop.f32.mrf.mxu0
    %2618 = vdwg.mxu0
    %v2619 = vsub.f32 0.0, %v2577
    %v2620 = vsub.f32 0.0, %v2616
    %v2621 = vmul.f32 %v2619, 1.442695
    %v2622 = vpow.pop %v2621
    %v2623 = vmul.f32 %v2620, 1.442695
    %v2624 = vpow.pop %v2623
    %v2625 = vadd.f32 %v2622, 1.0
    %v2626 = vadd.f32 %v2624, 1.0
    %v2627 = vrcp.pop %v2625
    %v2628 = vmul.f32 %v2625, %v2627
    %v2629 = vsub.f32 1.0, %v2628
    %v2630 = vmul.f32 %v2627, %v2629
    %v2631 = vadd.f32 %v2627, %v2630
    %vm2632 = vweird.f32 %v2625
    %vm2633 = vweird.f32 %v2627
    %vm2634 = vmor %vm2632, %vm2633
    %v2635 = vsel %vm2634, %v2627, %v2631
    %v2636 = vand.u32 2147483647, %v2625
    %vm2637 = vcmp.eq.f32.partialorder %v2636, 8.507059e+37
    %v2638 = vand.u32 %v2625, 2147483648
    %v2639 = vor.u32 1.1754944e-38, %v2638
    %v2640 = vsel %vm2637, %v2639, %v2635
    %v2641 = vmul.f32 1.0, %v2640
    %v2642 = vrcp.pop %v2626
    %v2643 = vmul.f32 %v2626, %v2642
    %v2644 = vsub.f32 1.0, %v2643
    %v2645 = vmul.f32 %v2642, %v2644
    %v2646 = vadd.f32 %v2642, %v2645
    %vm2647 = vweird.f32 %v2626
    %vm2648 = vweird.f32 %v2642
    %vm2649 = vmor %vm2647, %vm2648
    %v2650 = vsel %vm2649, %v2642, %v2646
    %v2651 = vand.u32 2147483647, %v2626
    %vm2652 = vcmp.eq.f32.partialorder %v2651, 8.507059e+37
    %v2653 = vand.u32 %v2626, 2147483648
    %v2654 = vor.u32 1.1754944e-38, %v2653
    %v2655 = vsel %vm2652, %v2654, %v2650
    %v2656 = vmul.f32 1.0, %v2655
    %2657 = vst [vmem:[#allocation8] sm:$0xff] %v2641
    %2658 = vst.msk [vmem:[#allocation8 + $0x8] sm:$0xff] %vm314, %v2656
    %v2659 = vmul.f32 %v2641, %v92
    %v2660 = vmul.f32 %v2656, %v93
    %v2661 = vsel %vm314, %v2660, 0.0
    %v2662 = vadd.f32 %v2659, %v2661
    %2663 = vadd.xlane.f32.xlu0 %v2662
    %v2664 = vpop.xlane.xlu0 %2663
    %v2665 = vld [vmem:[%s1] sm:$0x3]
    %v2667 = vperm.slane %v2665, 0
    %v2668 = vperm.slane %v2665, 1
    %v2671 = vmul.f32 %v92, %v2667
    %v2672 = vmul.f32 %v93, %v2668
    %v2673 = vsel %vm314, %v2672, 0.0
    %v2674 = vadd.f32 %v2671, %v2673
    %2675 = vadd.xlane.f32.xlu0 %v2674
    %v2676 = vpop.xlane.xlu0 %2675
    %v2677 = vrcp.pop %v2676
    %v2678 = vmul.f32 %v2676, %v2677
    %v2679 = vsub.f32 1.0, %v2678
    %v2680 = vmul.f32 %v2677, %v2679
    %v2681 = vadd.f32 %v2677, %v2680
    %vm2682 = vweird.f32 %v2676
    %vm2683 = vweird.f32 %v2677
    %vm2684 = vmor %vm2682, %vm2683
    %v2685 = vsel %vm2684, %v2677, %v2681
    %v2686 = vand.u32 2147483647, %v2676
    %vm2687 = vcmp.eq.f32.partialorder %v2686, 8.507059e+37
    %v2688 = vand.u32 %v2676, 2147483648
    %v2689 = vor.u32 1.1754944e-38, %v2688
    %v2690 = vsel %vm2687, %v2689, %v2685
    %v2691 = vmul.f32 %v2664, %v2690
    %vm2692 = vcmask 7168
    %2693 = vst.msk [vmem:[%s12] sm:$0xff] %vm2692, %v2691
    // Predicated region
    $region62: #{tpu_custom_call.1} parent=1 // pred_check
      _
    $region63: #{tpu_custom_call.1} parent=1 // pred_check_branch
      %2695 = sbr.rel (0) target = $region65
    $region64: #{tpu_custom_call.1} parent=1 // pred_region
      _
    $region65: #{tpu_custom_call.1} parent=1 // pred_fallthru
      _
    // Predicated region
    $region66: #{tpu_custom_call.1} parent=1 // pred_check
      _
    $region67: #{tpu_custom_call.1} parent=1 // pred_check_branch
      %2697 = sbr.rel (0) target = $region69
    $region68: #{tpu_custom_call.1} parent=1 // pred_region
      %2699 = vsyncadd [#allocation4], 0
      %s2701 = sshll.u32 [#allocation8], 4
      %s2702 = int_to_ptr.vmem [resolvable:$true] %s2701
      %s2703 = sshll.u32 %s13, 4
      %s2704 = int_to_ptr.hbm [resolvable:$true] %s2703
      %2706 = dma.vmem_to_hbm [thread:$0]  %s2702, 256, %s2704, [#allocation4]
    $region69: #{tpu_custom_call.1} parent=1 // pred_fallthru
      _
    // Predicated region
    $region70: #{tpu_custom_call.1} parent=1 // pred_check
      _
    $region71: #{tpu_custom_call.1} parent=1 // pred_check_branch
      %2708 = sbr.rel (0) target = $region73
    $region72: #{tpu_custom_call.1} parent=1 // pred_region
      _
    $region73: #{tpu_custom_call.1} parent=1 // pred_fallthru
      _
    // Predicated region
    $region74: #{tpu_custom_call.1} parent=1 // pred_check
      _
    $region75: #{tpu_custom_call.1} parent=1 // pred_check_branch
      %2710 = sbr.rel (0) target = $region77
    $region76: #{tpu_custom_call.1} parent=1 // pred_region
      %2712 = dma.done [#allocation4], 256
    $region77: #{tpu_custom_call.1} parent=1 // pred_fallthru
      _
    %2713 = vsyncpa [#allocation3], 1
    %2714 = vsyncpa [#allocation6], 1
    %2715 = vsyncpa [#allocation4], 1

</llo_original>
